<compile_context>
chip_gen: v5e
topology: v5e:2x2
jax: 0.10.0
libtpu: 0.0.40
codegen_flags: <defaults>
</compile_context>

<pallas_src>
import jax
import jax.numpy as jnp
import numpy as np
from jax import lax
from jax.experimental import pallas as pl
from jax.experimental.pallas import tpu as pltpu


# ----------------------------------------------------------------------------
# Pallas kernel: fused bidirectional LSTM recurrence (one call per layer)
# ----------------------------------------------------------------------------
def bilstm_kernel(xpf_ref, xpb_ref, whhf_ref, whhb_ref,
                  out_f_ref, out_b_ref, hT_ref, cT_ref):
    """Fused bi-directional LSTM recurrence, single invocation (no grid).

    xpf_ref : (S, B, 4H)  precomputed x @ W_ih_fwd^T + (b_ih + b_hh)_fwd
    xpb_ref : (S, B, 4H)  precomputed x @ W_ih_bwd^T + (b_ih + b_hh)_bwd
    whhf_ref: (H, 4H)     recurrent weights, forward direction
    whhb_ref: (H, 4H)     recurrent weights, backward direction
    out_f_ref: (S, B, H)  per-step forward hidden state
    out_b_ref: (S, B, H)  per-step backward hidden state (original time order)
    hT_ref  : (2, B, H)   final hidden (fwd, bwd)
    cT_ref  : (2, B, H)   final cell   (fwd, bwd)
    """
    S, B, _ = xpf_ref.shape
    H = whhf_ref.shape[0]

    # Load the (constant) recurrent weights once.
    whh_f = whhf_ref[...]
    whh_b = whhb_ref[...]

    def cell_update(gates, c):
        # PyTorch gate order: i, f, g, o
        i_g = jax.nn.sigmoid(gates[:, 0 * H:1 * H])
        f_g = jax.nn.sigmoid(gates[:, 1 * H:2 * H])
        g_g = jnp.tanh(gates[:, 2 * H:3 * H])
        o_g = jax.nn.sigmoid(gates[:, 3 * H:4 * H])
        c_new = f_g * c + i_g * g_g
        h_new = o_g * jnp.tanh(c_new)
        return h_new, c_new

    def body(t, carry):
        h_f, c_f, h_b, c_b = carry

        # ---- forward direction, timestep t ----
        gates_f = xpf_ref[t] + jnp.dot(h_f, whh_f,
                                       preferred_element_type=jnp.float32)
        h_f, c_f = cell_update(gates_f, c_f)
        out_f_ref[t] = h_f

        # ---- backward direction, timestep S-1-t (reversal done via index) ----
        tb = S - 1 - t
        gates_b = xpb_ref[tb] + jnp.dot(h_b, whh_b,
                                        preferred_element_type=jnp.float32)
        h_b, c_b = cell_update(gates_b, c_b)
        out_b_ref[tb] = h_b

        return (h_f, c_f, h_b, c_b)

    zeros = jnp.zeros((B, H), jnp.float32)
    h_f, c_f, h_b, c_b = lax.fori_loop(0, S, body,
                                       (zeros, zeros, zeros, zeros),
                                       unroll=True)

    # Final states written exactly once (no per-step redundant stores).
    hT_ref[0] = h_f
    hT_ref[1] = h_b
    cT_ref[0] = c_f
    cT_ref[1] = c_b


# ----------------------------------------------------------------------------
# Wrappers
# ----------------------------------------------------------------------------
def run_bilstm_layer(x, p_f, p_b):
    """One bidirectional LSTM layer.

    x: (S, B, E).  Returns outputs (S, B, 2H), hT (2, B, H), cT (2, B, H).
    """
    S, B, E = x.shape
    H = p_f["whh_t"].shape[0]

    # Hoisted input projection: one big MXU-friendly matmul per direction,
    # done outside the (inherently sequential) recurrence.
    x2d = x.reshape(S * B, E)
    xp_f = (x2d @ p_f["wih_t"] + p_f["b"]).reshape(S, B, 4 * H)
    xp_b = (x2d @ p_b["wih_t"] + p_b["b"]).reshape(S, B, 4 * H)

    out_f, out_b, hT, cT = pl.pallas_call(
        bilstm_kernel,
        out_shape=(jax.ShapeDtypeStruct((S, B, H), jnp.float32),
                   jax.ShapeDtypeStruct((S, B, H), jnp.float32),
                   jax.ShapeDtypeStruct((2, B, H), jnp.float32),
                   jax.ShapeDtypeStruct((2, B, H), jnp.float32)),
        compiler_params=pltpu.CompilerParams(
            vmem_limit_bytes=64 * 1024 * 1024),
    )(xp_f, xp_b, p_f["whh_t"], p_b["whh_t"])

    outputs = jnp.concatenate([out_f, out_b], axis=-1)   # (S, B, 2H)
    return outputs, hT, cT


def encoder_forward(src, params, n_layers):
    """src: (S, B) int32 token ids.  Returns (outputs, hidden, cell)."""
    embedded = params["embedding"][src]          # (S, B, E) -- gather glue
    # TODO(synk): dropout applied as identity (eval-mode semantics);
    # training-mode stochastic dropout not implemented.
    x = embedded

    h_list, c_list = [], []
    for layer in range(n_layers):
        p_f = params["lstm"][(layer, 0)]
        p_b = params["lstm"][(layer, 1)]
        x, hT, cT = run_bilstm_layer(x, p_f, p_b)
        h_list.append(hT)                        # (2, B, H): fwd, bwd
        c_list.append(cT)

    outputs = x                                  # (S, B, 2H) from last layer
    hidden = jnp.concatenate(h_list, axis=0)     # (n_layers*2, B, H), PyTorch order
    cell = jnp.concatenate(c_list, axis=0)

    # fc_hidden / fc_cell: tiny matmuls -> plain jnp so XLA fuses them
    # (a dedicated pallas_call would be pure launch/DMA overhead).
    hid_cat = jnp.concatenate([hidden[0], hidden[1]], axis=-1)   # (B, 2H)
    cell_cat = jnp.concatenate([cell[0], cell[1]], axis=-1)      # (B, 2H)
    h_out = (hid_cat @ params["fc_hidden_w_t"] + params["fc_hidden_b"])[None]
    c_out = (cell_cat @ params["fc_cell_w_t"] + params["fc_cell_b"])[None]
    return outputs, h_out, c_out                 # (S,B,2H), (1,B,H), (1,B,H)


# ----------------------------------------------------------------------------
# Pure-JAX reference (for a sanity check)
# ----------------------------------------------------------------------------
def lstm_dir_ref(x, wih_t, whh_t, b):
    H = whh_t.shape[0]

    def step(carry, xt):
        h, c = carry
        gates = xt @ wih_t + h @ whh_t + b
        i_g = jax.nn.sigmoid(gates[:, 0 * H:1 * H])
        f_g = jax.nn.sigmoid(gates[:, 1 * H:2 * H])
        g_g = jnp.tanh(gates[:, 2 * H:3 * H])
        o_g = jax.nn.sigmoid(gates[:, 3 * H:4 * H])
        c_new = f_g * c + i_g * g_g
        h_new = o_g * jnp.tanh(c_new)
        return (h_new, c_new), h_new

    B = x.shape[1]
    h0 = jnp.zeros((B, H), jnp.float32)
    c0 = jnp.zeros((B, H), jnp.float32)
    (hT, cT), outs = lax.scan(step, (h0, c0), x)
    return outs, hT, cT


def encoder_forward_ref(src, params, n_layers):
    x = params["embedding"][src]
    hs, cs = [], []
    for layer in range(n_layers):
        dir_outs = []
        for d in range(2):
            p = params["lstm"][(layer, d)]
            xin = x if d == 0 else x[::-1]
            outs, hT, cT = lstm_dir_ref(xin, p["wih_t"], p["whh_t"], p["b"])
            if d == 1:
                outs = outs[::-1]
            dir_outs.append(outs)
            hs.append(hT)
            cs.append(cT)
        x = jnp.concatenate(dir_outs, axis=-1)
    hidden = jnp.stack(hs, axis=0)
    cell = jnp.stack(cs, axis=0)
    hid_cat = jnp.concatenate([hidden[0], hidden[1]], axis=-1)
    cell_cat = jnp.concatenate([cell[0], cell[1]], axis=-1)
    h_out = (hid_cat @ params["fc_hidden_w_t"] + params["fc_hidden_b"])[None]
    c_out = (cell_cat @ params["fc_cell_w_t"] + params["fc_cell_b"])[None]
    return x, h_out, c_out


# ----------------------------------------------------------------------------
# Deterministic parameter init
# ----------------------------------------------------------------------------
def init_params(key, input_dim, embedding_dim, hidden_dim, n_layers):
    def u(key, shape, scale=0.1):
        return jax.random.uniform(key, shape, jnp.float32, -scale, scale)

    keys = iter(jax.random.split(key, 64))
    params = {"embedding": u(next(keys), (input_dim, embedding_dim)), "lstm": {}}
    H = hidden_dim
    for layer in range(n_layers):
        in_size = embedding_dim if layer == 0 else 2 * hidden_dim
        for d in range(2):
            w_ih = u(next(keys), (4 * H, in_size))   # PyTorch layout (4H, in)
            w_hh = u(next(keys), (4 * H, H))
            b_ih = u(next(keys), (4 * H,))
            b_hh = u(next(keys), (4 * H,))
            params["lstm"][(layer, d)] = {
                "wih_t": w_ih.T,                     # (in, 4H)
                "whh_t": w_hh.T,                     # (H, 4H)
                "b": (b_ih + b_hh)[None, :],         # (1, 4H)
            }
    fc_h_w = u(next(keys), (H, 2 * H))               # PyTorch Linear (out, in)
    fc_h_b = u(next(keys), (H,))
    fc_c_w = u(next(keys), (H, 2 * H))
    fc_c_b = u(next(keys), (H,))
    params["fc_hidden_w_t"] = fc_h_w.T               # (2H, H)
    params["fc_hidden_b"] = fc_h_b[None, :]          # (1, H)
    params["fc_cell_w_t"] = fc_c_w.T
    params["fc_cell_b"] = fc_c_b[None, :]
    return params


# ----------------------------------------------------------------------------
if __name__ == "__main__":
    # Small shapes consistent with the module.
    INPUT_DIM = 50        # vocab size
    EMBEDDING_DIM = 32
    HIDDEN_DIM = 32
    N_LAYERS = 1
    SEQ_LEN = 8
    BATCH = 2

    key = jax.random.PRNGKey(0)
    k_param, k_src = jax.random.split(key)
    params = init_params(k_param, INPUT_DIM, EMBEDDING_DIM, HIDDEN_DIM, N_LAYERS)
    src = jax.random.randint(k_src, (SEQ_LEN, BATCH), 0, INPUT_DIM, jnp.int32)

    fwd = jax.jit(encoder_forward, static_argnums=2)
    outputs, hidden, cell = fwd(src, params, N_LAYERS)
    jax.block_until_ready((outputs, hidden, cell))

    # Shape checks (match PyTorch semantics).
    assert outputs.shape == (SEQ_LEN, BATCH, 2 * HIDDEN_DIM)
    assert hidden.shape == (1, BATCH, HIDDEN_DIM)
    assert cell.shape == (1, BATCH, HIDDEN_DIM)

    # Numeric sanity check against a pure-JAX reference.
    ref_out, ref_h, ref_c = encoder_forward_ref(src, params, N_LAYERS)
    np.testing.assert_allclose(np.asarray(outputs), np.asarray(ref_out),
                               rtol=2e-2, atol=2e-2)
    np.testing.assert_allclose(np.asarray(hidden), np.asarray(ref_h),
                               rtol=2e-2, atol=2e-2)
    np.testing.assert_allclose(np.asarray(cell), np.asarray(ref_c),
                               rtol=2e-2, atol=2e-2)

    print("KERNEL_OK")
</pallas_src>

<mosaic_0001>
module attributes {stable_mosaic.version = 11 : i64} {
  func.func @bilstm_kernel(%arg0: memref<8x2x128xf32, #tpu.memory_space<vmem>>, %arg1: memref<8x2x128xf32, #tpu.memory_space<vmem>>, %arg2: memref<32x128xf32, #tpu.memory_space<vmem>>, %arg3: memref<32x128xf32, #tpu.memory_space<vmem>>, %arg4: memref<8x2x32xf32, #tpu.memory_space<vmem>>, %arg5: memref<8x2x32xf32, #tpu.memory_space<vmem>>, %arg6: memref<2x2x32xf32, #tpu.memory_space<vmem>>, %arg7: memref<2x2x32xf32, #tpu.memory_space<vmem>>) attributes {dimension_semantics = [], scalar_prefetch = 0 : i64, scratch_operands = 0 : i64, tpu.core_type = #tpu.core_type<tc>} {
    %c0 = arith.constant 0 : index
    %c0_0 = arith.constant 0 : index
    %0 = vector.load %arg2[%c0, %c0_0] : memref<32x128xf32, #tpu.memory_space<vmem>>, vector<32x128xf32>
    %c0_1 = arith.constant 0 : index
    %c0_2 = arith.constant 0 : index
    %1 = vector.load %arg3[%c0_1, %c0_2] : memref<32x128xf32, #tpu.memory_space<vmem>>, vector<32x128xf32>
    %cst = arith.constant 0.000000e+00 : f32
    %2 = vector.broadcast %cst : f32 to vector<2x32xf32>
    %c0_i32 = arith.constant 0 : i32
    %3 = arith.index_cast %c0_i32 : i32 to index
    %c0_3 = arith.constant 0 : index
    %c0_4 = arith.constant 0 : index
    %4 = vector.load %arg0[%3, %c0_3, %c0_4] : memref<8x2x128xf32, #tpu.memory_space<vmem>>, vector<1x2x128xf32>
    %5 = vector.shape_cast %4 : vector<1x2x128xf32> to vector<2x128xf32>
    %cst_5 = arith.constant dense<0.000000e+00> : vector<2x128xf32>
    %6 = tpu.matmul %2, %0, %cst_5 {dimension_numbers = #tpu.dot_dimension_numbers<[1], [0], [0], [1], [0, 0, 1, 1], [], []>} : vector<2x32xf32>, vector<32x128xf32>, vector<2x128xf32> -> vector<2x128xf32>
    %7 = arith.addf %5, %6 : vector<2x128xf32>
    %8 = vector.extract_strided_slice %7 {offsets = [0, 0], sizes = [2, 32], strides = [1, 1]} : vector<2x128xf32> to vector<2x32xf32>
    %9 = arith.negf %8 : vector<2x32xf32>
    %10 = math.exp %9 : vector<2x32xf32>
    %cst_6 = arith.constant 1.000000e+00 : f32
    %11 = vector.broadcast %cst_6 : f32 to vector<2x32xf32>
    %12 = arith.addf %11, %10 : vector<2x32xf32>
    %13 = arith.divf %11, %12 : vector<2x32xf32>
    %14 = vector.extract_strided_slice %7 {offsets = [0, 32], sizes = [2, 32], strides = [1, 1]} : vector<2x128xf32> to vector<2x32xf32>
    %15 = arith.negf %14 : vector<2x32xf32>
    %16 = math.exp %15 : vector<2x32xf32>
    %cst_7 = arith.constant 1.000000e+00 : f32
    %17 = vector.broadcast %cst_7 : f32 to vector<2x32xf32>
    %18 = arith.addf %17, %16 : vector<2x32xf32>
    %19 = arith.divf %17, %18 : vector<2x32xf32>
    %20 = vector.extract_strided_slice %7 {offsets = [0, 64], sizes = [2, 32], strides = [1, 1]} : vector<2x128xf32> to vector<2x32xf32>
    %21 = math.tanh %20 : vector<2x32xf32>
    %22 = vector.extract_strided_slice %7 {offsets = [0, 96], sizes = [2, 32], strides = [1, 1]} : vector<2x128xf32> to vector<2x32xf32>
    %23 = arith.negf %22 : vector<2x32xf32>
    %24 = math.exp %23 : vector<2x32xf32>
    %cst_8 = arith.constant 1.000000e+00 : f32
    %25 = vector.broadcast %cst_8 : f32 to vector<2x32xf32>
    %26 = arith.addf %25, %24 : vector<2x32xf32>
    %27 = arith.divf %25, %26 : vector<2x32xf32>
    %28 = arith.mulf %19, %2 : vector<2x32xf32>
    %29 = arith.mulf %13, %21 : vector<2x32xf32>
    %30 = arith.addf %28, %29 : vector<2x32xf32>
    %31 = math.tanh %30 : vector<2x32xf32>
    %32 = arith.mulf %27, %31 : vector<2x32xf32>
    %33 = arith.index_cast %c0_i32 : i32 to index
    %c0_9 = arith.constant 0 : index
    %c0_10 = arith.constant 0 : index
    %34 = vector.load %arg4[%33, %c0_9, %c0_10] : memref<8x2x32xf32, #tpu.memory_space<vmem>>, vector<1x2x32xf32>
    %35 = vector.shape_cast %34 : vector<1x2x32xf32> to vector<2x32xf32>
    %36 = vector.shape_cast %32 : vector<2x32xf32> to vector<1x2x32xf32>
    tpu.vector_store %arg4[%33, %c0_9, %c0_10], %36 {strides = array<i32>} : memref<8x2x32xf32, #tpu.memory_space<vmem>>, vector<1x2x32xf32>,
    %c7_i32 = arith.constant 7 : i32
    %37 = arith.subi %c7_i32, %c0_i32 : i32
    %38 = arith.index_cast %37 : i32 to index
    %c0_11 = arith.constant 0 : index
    %c0_12 = arith.constant 0 : index
    %39 = vector.load %arg1[%38, %c0_11, %c0_12] : memref<8x2x128xf32, #tpu.memory_space<vmem>>, vector<1x2x128xf32>
    %40 = vector.shape_cast %39 : vector<1x2x128xf32> to vector<2x128xf32>
    %cst_13 = arith.constant dense<0.000000e+00> : vector<2x128xf32>
    %41 = tpu.matmul %2, %1, %cst_13 {dimension_numbers = #tpu.dot_dimension_numbers<[1], [0], [0], [1], [0, 0, 1, 1], [], []>} : vector<2x32xf32>, vector<32x128xf32>, vector<2x128xf32> -> vector<2x128xf32>
    %42 = arith.addf %40, %41 : vector<2x128xf32>
    %43 = vector.extract_strided_slice %42 {offsets = [0, 0], sizes = [2, 32], strides = [1, 1]} : vector<2x128xf32> to vector<2x32xf32>
    %44 = arith.negf %43 : vector<2x32xf32>
    %45 = math.exp %44 : vector<2x32xf32>
    %cst_14 = arith.constant 1.000000e+00 : f32
    %46 = vector.broadcast %cst_14 : f32 to vector<2x32xf32>
    %47 = arith.addf %46, %45 : vector<2x32xf32>
    %48 = arith.divf %46, %47 : vector<2x32xf32>
    %49 = vector.extract_strided_slice %42 {offsets = [0, 32], sizes = [2, 32], strides = [1, 1]} : vector<2x128xf32> to vector<2x32xf32>
    %50 = arith.negf %49 : vector<2x32xf32>
    %51 = math.exp %50 : vector<2x32xf32>
    %cst_15 = arith.constant 1.000000e+00 : f32
    %52 = vector.broadcast %cst_15 : f32 to vector<2x32xf32>
    %53 = arith.addf %52, %51 : vector<2x32xf32>
    %54 = arith.divf %52, %53 : vector<2x32xf32>
    %55 = vector.extract_strided_slice %42 {offsets = [0, 64], sizes = [2, 32], strides = [1, 1]} : vector<2x128xf32> to vector<2x32xf32>
    %56 = math.tanh %55 : vector<2x32xf32>
    %57 = vector.extract_strided_slice %42 {offsets = [0, 96], sizes = [2, 32], strides = [1, 1]} : vector<2x128xf32> to vector<2x32xf32>
    %58 = arith.negf %57 : vector<2x32xf32>
    %59 = math.exp %58 : vector<2x32xf32>
    %cst_16 = arith.constant 1.000000e+00 : f32
    %60 = vector.broadcast %cst_16 : f32 to vector<2x32xf32>
    %61 = arith.addf %60, %59 : vector<2x32xf32>
    %62 = arith.divf %60, %61 : vector<2x32xf32>
    %63 = arith.mulf %54, %2 : vector<2x32xf32>
    %64 = arith.mulf %48, %56 : vector<2x32xf32>
    %65 = arith.addf %63, %64 : vector<2x32xf32>
    %66 = math.tanh %65 : vector<2x32xf32>
    %67 = arith.mulf %62, %66 : vector<2x32xf32>
    %68 = arith.index_cast %37 : i32 to index
    %c0_17 = arith.constant 0 : index
    %c0_18 = arith.constant 0 : index
    %69 = vector.load %arg5[%68, %c0_17, %c0_18] : memref<8x2x32xf32, #tpu.memory_space<vmem>>, vector<1x2x32xf32>
    %70 = vector.shape_cast %69 : vector<1x2x32xf32> to vector<2x32xf32>
    %71 = vector.shape_cast %67 : vector<2x32xf32> to vector<1x2x32xf32>
    tpu.vector_store %arg5[%68, %c0_17, %c0_18], %71 {strides = array<i32>} : memref<8x2x32xf32, #tpu.memory_space<vmem>>, vector<1x2x32xf32>,
    %c1_i32 = arith.constant 1 : i32
    %72 = arith.index_cast %c1_i32 : i32 to index
    %c0_19 = arith.constant 0 : index
    %c0_20 = arith.constant 0 : index
    %73 = vector.load %arg0[%72, %c0_19, %c0_20] : memref<8x2x128xf32, #tpu.memory_space<vmem>>, vector<1x2x128xf32>
    %74 = vector.shape_cast %73 : vector<1x2x128xf32> to vector<2x128xf32>
    %cst_21 = arith.constant dense<0.000000e+00> : vector<2x128xf32>
    %75 = tpu.matmul %32, %0, %cst_21 {dimension_numbers = #tpu.dot_dimension_numbers<[1], [0], [0], [1], [0, 0, 1, 1], [], []>} : vector<2x32xf32>, vector<32x128xf32>, vector<2x128xf32> -> vector<2x128xf32>
    %76 = arith.addf %74, %75 : vector<2x128xf32>
    %77 = vector.extract_strided_slice %76 {offsets = [0, 0], sizes = [2, 32], strides = [1, 1]} : vector<2x128xf32> to vector<2x32xf32>
    %78 = arith.negf %77 : vector<2x32xf32>
    %79 = math.exp %78 : vector<2x32xf32>
    %cst_22 = arith.constant 1.000000e+00 : f32
    %80 = vector.broadcast %cst_22 : f32 to vector<2x32xf32>
    %81 = arith.addf %80, %79 : vector<2x32xf32>
    %82 = arith.divf %80, %81 : vector<2x32xf32>
    %83 = vector.extract_strided_slice %76 {offsets = [0, 32], sizes = [2, 32], strides = [1, 1]} : vector<2x128xf32> to vector<2x32xf32>
    %84 = arith.negf %83 : vector<2x32xf32>
    %85 = math.exp %84 : vector<2x32xf32>
    %cst_23 = arith.constant 1.000000e+00 : f32
    %86 = vector.broadcast %cst_23 : f32 to vector<2x32xf32>
    %87 = arith.addf %86, %85 : vector<2x32xf32>
    %88 = arith.divf %86, %87 : vector<2x32xf32>
    %89 = vector.extract_strided_slice %76 {offsets = [0, 64], sizes = [2, 32], strides = [1, 1]} : vector<2x128xf32> to vector<2x32xf32>
    %90 = math.tanh %89 : vector<2x32xf32>
    %91 = vector.extract_strided_slice %76 {offsets = [0, 96], sizes = [2, 32], strides = [1, 1]} : vector<2x128xf32> to vector<2x32xf32>
    %92 = arith.negf %91 : vector<2x32xf32>
    %93 = math.exp %92 : vector<2x32xf32>
    %cst_24 = arith.constant 1.000000e+00 : f32
    %94 = vector.broadcast %cst_24 : f32 to vector<2x32xf32>
    %95 = arith.addf %94, %93 : vector<2x32xf32>
    %96 = arith.divf %94, %95 : vector<2x32xf32>
    %97 = arith.mulf %88, %30 : vector<2x32xf32>
    %98 = arith.mulf %82, %90 : vector<2x32xf32>
    %99 = arith.addf %97, %98 : vector<2x32xf32>
    %100 = math.tanh %99 : vector<2x32xf32>
    %101 = arith.mulf %96, %100 : vector<2x32xf32>
    %102 = arith.index_cast %c1_i32 : i32 to index
    %c0_25 = arith.constant 0 : index
    %c0_26 = arith.constant 0 : index
    %103 = vector.load %arg4[%102, %c0_25, %c0_26] : memref<8x2x32xf32, #tpu.memory_space<vmem>>, vector<1x2x32xf32>
    %104 = vector.shape_cast %103 : vector<1x2x32xf32> to vector<2x32xf32>
    %105 = vector.shape_cast %101 : vector<2x32xf32> to vector<1x2x32xf32>
    tpu.vector_store %arg4[%102, %c0_25, %c0_26], %105 {strides = array<i32>} : memref<8x2x32xf32, #tpu.memory_space<vmem>>, vector<1x2x32xf32>,
    %c7_i32_27 = arith.constant 7 : i32
    %106 = arith.subi %c7_i32_27, %c1_i32 : i32
    %107 = arith.index_cast %106 : i32 to index
    %c0_28 = arith.constant 0 : index
    %c0_29 = arith.constant 0 : index
    %108 = vector.load %arg1[%107, %c0_28, %c0_29] : memref<8x2x128xf32, #tpu.memory_space<vmem>>, vector<1x2x128xf32>
    %109 = vector.shape_cast %108 : vector<1x2x128xf32> to vector<2x128xf32>
    %cst_30 = arith.constant dense<0.000000e+00> : vector<2x128xf32>
    %110 = tpu.matmul %67, %1, %cst_30 {dimension_numbers = #tpu.dot_dimension_numbers<[1], [0], [0], [1], [0, 0, 1, 1], [], []>} : vector<2x32xf32>, vector<32x128xf32>, vector<2x128xf32> -> vector<2x128xf32>
    %111 = arith.addf %109, %110 : vector<2x128xf32>
    %112 = vector.extract_strided_slice %111 {offsets = [0, 0], sizes = [2, 32], strides = [1, 1]} : vector<2x128xf32> to vector<2x32xf32>
    %113 = arith.negf %112 : vector<2x32xf32>
    %114 = math.exp %113 : vector<2x32xf32>
    %cst_31 = arith.constant 1.000000e+00 : f32
    %115 = vector.broadcast %cst_31 : f32 to vector<2x32xf32>
    %116 = arith.addf %115, %114 : vector<2x32xf32>
    %117 = arith.divf %115, %116 : vector<2x32xf32>
    %118 = vector.extract_strided_slice %111 {offsets = [0, 32], sizes = [2, 32], strides = [1, 1]} : vector<2x128xf32> to vector<2x32xf32>
    %119 = arith.negf %118 : vector<2x32xf32>
    %120 = math.exp %119 : vector<2x32xf32>
    %cst_32 = arith.constant 1.000000e+00 : f32
    %121 = vector.broadcast %cst_32 : f32 to vector<2x32xf32>
    %122 = arith.addf %121, %120 : vector<2x32xf32>
    %123 = arith.divf %121, %122 : vector<2x32xf32>
    %124 = vector.extract_strided_slice %111 {offsets = [0, 64], sizes = [2, 32], strides = [1, 1]} : vector<2x128xf32> to vector<2x32xf32>
    %125 = math.tanh %124 : vector<2x32xf32>
    %126 = vector.extract_strided_slice %111 {offsets = [0, 96], sizes = [2, 32], strides = [1, 1]} : vector<2x128xf32> to vector<2x32xf32>
    %127 = arith.negf %126 : vector<2x32xf32>
    %128 = math.exp %127 : vector<2x32xf32>
    %cst_33 = arith.constant 1.000000e+00 : f32
    %129 = vector.broadcast %cst_33 : f32 to vector<2x32xf32>
    %130 = arith.addf %129, %128 : vector<2x32xf32>
    %131 = arith.divf %129, %130 : vector<2x32xf32>
    %132 = arith.mulf %123, %65 : vector<2x32xf32>
    %133 = arith.mulf %117, %125 : vector<2x32xf32>
    %134 = arith.addf %132, %133 : vector<2x32xf32>
    %135 = math.tanh %134 : vector<2x32xf32>
    %136 = arith.mulf %131, %135 : vector<2x32xf32>
    %137 = arith.index_cast %106 : i32 to index
    %c0_34 = arith.constant 0 : index
    %c0_35 = arith.constant 0 : index
    %138 = vector.load %arg5[%137, %c0_34, %c0_35] : memref<8x2x32xf32, #tpu.memory_space<vmem>>, vector<1x2x32xf32>
    %139 = vector.shape_cast %138 : vector<1x2x32xf32> to vector<2x32xf32>
    %140 = vector.shape_cast %136 : vector<2x32xf32> to vector<1x2x32xf32>
    tpu.vector_store %arg5[%137, %c0_34, %c0_35], %140 {strides = array<i32>} : memref<8x2x32xf32, #tpu.memory_space<vmem>>, vector<1x2x32xf32>,
    %c2_i32 = arith.constant 2 : i32
    %141 = arith.index_cast %c2_i32 : i32 to index
    %c0_36 = arith.constant 0 : index
    %c0_37 = arith.constant 0 : index
    %142 = vector.load %arg0[%141, %c0_36, %c0_37] : memref<8x2x128xf32, #tpu.memory_space<vmem>>, vector<1x2x128xf32>
    %143 = vector.shape_cast %142 : vector<1x2x128xf32> to vector<2x128xf32>
    %cst_38 = arith.constant dense<0.000000e+00> : vector<2x128xf32>
    %144 = tpu.matmul %101, %0, %cst_38 {dimension_numbers = #tpu.dot_dimension_numbers<[1], [0], [0], [1], [0, 0, 1, 1], [], []>} : vector<2x32xf32>, vector<32x128xf32>, vector<2x128xf32> -> vector<2x128xf32>
    %145 = arith.addf %143, %144 : vector<2x128xf32>
    %146 = vector.extract_strided_slice %145 {offsets = [0, 0], sizes = [2, 32], strides = [1, 1]} : vector<2x128xf32> to vector<2x32xf32>
    %147 = arith.negf %146 : vector<2x32xf32>
    %148 = math.exp %147 : vector<2x32xf32>
    %cst_39 = arith.constant 1.000000e+00 : f32
    %149 = vector.broadcast %cst_39 : f32 to vector<2x32xf32>
    %150 = arith.addf %149, %148 : vector<2x32xf32>
    %151 = arith.divf %149, %150 : vector<2x32xf32>
    %152 = vector.extract_strided_slice %145 {offsets = [0, 32], sizes = [2, 32], strides = [1, 1]} : vector<2x128xf32> to vector<2x32xf32>
    %153 = arith.negf %152 : vector<2x32xf32>
    %154 = math.exp %153 : vector<2x32xf32>
    %cst_40 = arith.constant 1.000000e+00 : f32
    %155 = vector.broadcast %cst_40 : f32 to vector<2x32xf32>
    %156 = arith.addf %155, %154 : vector<2x32xf32>
    %157 = arith.divf %155, %156 : vector<2x32xf32>
    %158 = vector.extract_strided_slice %145 {offsets = [0, 64], sizes = [2, 32], strides = [1, 1]} : vector<2x128xf32> to vector<2x32xf32>
    %159 = math.tanh %158 : vector<2x32xf32>
    %160 = vector.extract_strided_slice %145 {offsets = [0, 96], sizes = [2, 32], strides = [1, 1]} : vector<2x128xf32> to vector<2x32xf32>
    %161 = arith.negf %160 : vector<2x32xf32>
    %162 = math.exp %161 : vector<2x32xf32>
    %cst_41 = arith.constant 1.000000e+00 : f32
    %163 = vector.broadcast %cst_41 : f32 to vector<2x32xf32>
    %164 = arith.addf %163, %162 : vector<2x32xf32>
    %165 = arith.divf %163, %164 : vector<2x32xf32>
    %166 = arith.mulf %157, %99 : vector<2x32xf32>
    %167 = arith.mulf %151, %159 : vector<2x32xf32>
    %168 = arith.addf %166, %167 : vector<2x32xf32>
    %169 = math.tanh %168 : vector<2x32xf32>
    %170 = arith.mulf %165, %169 : vector<2x32xf32>
    %171 = arith.index_cast %c2_i32 : i32 to index
    %c0_42 = arith.constant 0 : index
    %c0_43 = arith.constant 0 : index
    %172 = vector.load %arg4[%171, %c0_42, %c0_43] : memref<8x2x32xf32, #tpu.memory_space<vmem>>, vector<1x2x32xf32>
    %173 = vector.shape_cast %172 : vector<1x2x32xf32> to vector<2x32xf32>
    %174 = vector.shape_cast %170 : vector<2x32xf32> to vector<1x2x32xf32>
    tpu.vector_store %arg4[%171, %c0_42, %c0_43], %174 {strides = array<i32>} : memref<8x2x32xf32, #tpu.memory_space<vmem>>, vector<1x2x32xf32>,
    %c7_i32_44 = arith.constant 7 : i32
    %175 = arith.subi %c7_i32_44, %c2_i32 : i32
    %176 = arith.index_cast %175 : i32 to index
    %c0_45 = arith.constant 0 : index
    %c0_46 = arith.constant 0 : index
    %177 = vector.load %arg1[%176, %c0_45, %c0_46] : memref<8x2x128xf32, #tpu.memory_space<vmem>>, vector<1x2x128xf32>
    %178 = vector.shape_cast %177 : vector<1x2x128xf32> to vector<2x128xf32>
    %cst_47 = arith.constant dense<0.000000e+00> : vector<2x128xf32>
    %179 = tpu.matmul %136, %1, %cst_47 {dimension_numbers = #tpu.dot_dimension_numbers<[1], [0], [0], [1], [0, 0, 1, 1], [], []>} : vector<2x32xf32>, vector<32x128xf32>, vector<2x128xf32> -> vector<2x128xf32>
    %180 = arith.addf %178, %179 : vector<2x128xf32>
    %181 = vector.extract_strided_slice %180 {offsets = [0, 0], sizes = [2, 32], strides = [1, 1]} : vector<2x128xf32> to vector<2x32xf32>
    %182 = arith.negf %181 : vector<2x32xf32>
    %183 = math.exp %182 : vector<2x32xf32>
    %cst_48 = arith.constant 1.000000e+00 : f32
    %184 = vector.broadcast %cst_48 : f32 to vector<2x32xf32>
    %185 = arith.addf %184, %183 : vector<2x32xf32>
    %186 = arith.divf %184, %185 : vector<2x32xf32>
    %187 = vector.extract_strided_slice %180 {offsets = [0, 32], sizes = [2, 32], strides = [1, 1]} : vector<2x128xf32> to vector<2x32xf32>
    %188 = arith.negf %187 : vector<2x32xf32>
    %189 = math.exp %188 : vector<2x32xf32>
    %cst_49 = arith.constant 1.000000e+00 : f32
    %190 = vector.broadcast %cst_49 : f32 to vector<2x32xf32>
    %191 = arith.addf %190, %189 : vector<2x32xf32>
    %192 = arith.divf %190, %191 : vector<2x32xf32>
    %193 = vector.extract_strided_slice %180 {offsets = [0, 64], sizes = [2, 32], strides = [1, 1]} : vector<2x128xf32> to vector<2x32xf32>
    %194 = math.tanh %193 : vector<2x32xf32>
    %195 = vector.extract_strided_slice %180 {offsets = [0, 96], sizes = [2, 32], strides = [1, 1]} : vector<2x128xf32> to vector<2x32xf32>
    %196 = arith.negf %195 : vector<2x32xf32>
    %197 = math.exp %196 : vector<2x32xf32>
    %cst_50 = arith.constant 1.000000e+00 : f32
    %198 = vector.broadcast %cst_50 : f32 to vector<2x32xf32>
    %199 = arith.addf %198, %197 : vector<2x32xf32>
    %200 = arith.divf %198, %199 : vector<2x32xf32>
    %201 = arith.mulf %192, %134 : vector<2x32xf32>
    %202 = arith.mulf %186, %194 : vector<2x32xf32>
    %203 = arith.addf %201, %202 : vector<2x32xf32>
    %204 = math.tanh %203 : vector<2x32xf32>
    %205 = arith.mulf %200, %204 : vector<2x32xf32>
    %206 = arith.index_cast %175 : i32 to index
    %c0_51 = arith.constant 0 : index
    %c0_52 = arith.constant 0 : index
    %207 = vector.load %arg5[%206, %c0_51, %c0_52] : memref<8x2x32xf32, #tpu.memory_space<vmem>>, vector<1x2x32xf32>
    %208 = vector.shape_cast %207 : vector<1x2x32xf32> to vector<2x32xf32>
    %209 = vector.shape_cast %205 : vector<2x32xf32> to vector<1x2x32xf32>
    tpu.vector_store %arg5[%206, %c0_51, %c0_52], %209 {strides = array<i32>} : memref<8x2x32xf32, #tpu.memory_space<vmem>>, vector<1x2x32xf32>,
    %c3_i32 = arith.constant 3 : i32
    %210 = arith.index_cast %c3_i32 : i32 to index
    %c0_53 = arith.constant 0 : index
    %c0_54 = arith.constant 0 : index
    %211 = vector.load %arg0[%210, %c0_53, %c0_54] : memref<8x2x128xf32, #tpu.memory_space<vmem>>, vector<1x2x128xf32>
    %212 = vector.shape_cast %211 : vector<1x2x128xf32> to vector<2x128xf32>
    %cst_55 = arith.constant dense<0.000000e+00> : vector<2x128xf32>
    %213 = tpu.matmul %170, %0, %cst_55 {dimension_numbers = #tpu.dot_dimension_numbers<[1], [0], [0], [1], [0, 0, 1, 1], [], []>} : vector<2x32xf32>, vector<32x128xf32>, vector<2x128xf32> -> vector<2x128xf32>
    %214 = arith.addf %212, %213 : vector<2x128xf32>
    %215 = vector.extract_strided_slice %214 {offsets = [0, 0], sizes = [2, 32], strides = [1, 1]} : vector<2x128xf32> to vector<2x32xf32>
    %216 = arith.negf %215 : vector<2x32xf32>
    %217 = math.exp %216 : vector<2x32xf32>
    %cst_56 = arith.constant 1.000000e+00 : f32
    %218 = vector.broadcast %cst_56 : f32 to vector<2x32xf32>
    %219 = arith.addf %218, %217 : vector<2x32xf32>
    %220 = arith.divf %218, %219 : vector<2x32xf32>
    %221 = vector.extract_strided_slice %214 {offsets = [0, 32], sizes = [2, 32], strides = [1, 1]} : vector<2x128xf32> to vector<2x32xf32>
    %222 = arith.negf %221 : vector<2x32xf32>
    %223 = math.exp %222 : vector<2x32xf32>
    %cst_57 = arith.constant 1.000000e+00 : f32
    %224 = vector.broadcast %cst_57 : f32 to vector<2x32xf32>
    %225 = arith.addf %224, %223 : vector<2x32xf32>
    %226 = arith.divf %224, %225 : vector<2x32xf32>
    %227 = vector.extract_strided_slice %214 {offsets = [0, 64], sizes = [2, 32], strides = [1, 1]} : vector<2x128xf32> to vector<2x32xf32>
    %228 = math.tanh %227 : vector<2x32xf32>
    %229 = vector.extract_strided_slice %214 {offsets = [0, 96], sizes = [2, 32], strides = [1, 1]} : vector<2x128xf32> to vector<2x32xf32>
    %230 = arith.negf %229 : vector<2x32xf32>
    %231 = math.exp %230 : vector<2x32xf32>
    %cst_58 = arith.constant 1.000000e+00 : f32
    %232 = vector.broadcast %cst_58 : f32 to vector<2x32xf32>
    %233 = arith.addf %232, %231 : vector<2x32xf32>
    %234 = arith.divf %232, %233 : vector<2x32xf32>
    %235 = arith.mulf %226, %168 : vector<2x32xf32>
    %236 = arith.mulf %220, %228 : vector<2x32xf32>
    %237 = arith.addf %235, %236 : vector<2x32xf32>
    %238 = math.tanh %237 : vector<2x32xf32>
    %239 = arith.mulf %234, %238 : vector<2x32xf32>
    %240 = arith.index_cast %c3_i32 : i32 to index
    %c0_59 = arith.constant 0 : index
    %c0_60 = arith.constant 0 : index
    %241 = vector.load %arg4[%240, %c0_59, %c0_60] : memref<8x2x32xf32, #tpu.memory_space<vmem>>, vector<1x2x32xf32>
    %242 = vector.shape_cast %241 : vector<1x2x32xf32> to vector<2x32xf32>
    %243 = vector.shape_cast %239 : vector<2x32xf32> to vector<1x2x32xf32>
    tpu.vector_store %arg4[%240, %c0_59, %c0_60], %243 {strides = array<i32>} : memref<8x2x32xf32, #tpu.memory_space<vmem>>, vector<1x2x32xf32>,
    %c7_i32_61 = arith.constant 7 : i32
    %244 = arith.subi %c7_i32_61, %c3_i32 : i32
    %245 = arith.index_cast %244 : i32 to index
    %c0_62 = arith.constant 0 : index
    %c0_63 = arith.constant 0 : index
    %246 = vector.load %arg1[%245, %c0_62, %c0_63] : memref<8x2x128xf32, #tpu.memory_space<vmem>>, vector<1x2x128xf32>
    %247 = vector.shape_cast %246 : vector<1x2x128xf32> to vector<2x128xf32>
    %cst_64 = arith.constant dense<0.000000e+00> : vector<2x128xf32>
    %248 = tpu.matmul %205, %1, %cst_64 {dimension_numbers = #tpu.dot_dimension_numbers<[1], [0], [0], [1], [0, 0, 1, 1], [], []>} : vector<2x32xf32>, vector<32x128xf32>, vector<2x128xf32> -> vector<2x128xf32>
    %249 = arith.addf %247, %248 : vector<2x128xf32>
    %250 = vector.extract_strided_slice %249 {offsets = [0, 0], sizes = [2, 32], strides = [1, 1]} : vector<2x128xf32> to vector<2x32xf32>
    %251 = arith.negf %250 : vector<2x32xf32>
    %252 = math.exp %251 : vector<2x32xf32>
    %cst_65 = arith.constant 1.000000e+00 : f32
    %253 = vector.broadcast %cst_65 : f32 to vector<2x32xf32>
    %254 = arith.addf %253, %252 : vector<2x32xf32>
    %255 = arith.divf %253, %254 : vector<2x32xf32>
    %256 = vector.extract_strided_slice %249 {offsets = [0, 32], sizes = [2, 32], strides = [1, 1]} : vector<2x128xf32> to vector<2x32xf32>
    %257 = arith.negf %256 : vector<2x32xf32>
    %258 = math.exp %257 : vector<2x32xf32>
    %cst_66 = arith.constant 1.000000e+00 : f32
    %259 = vector.broadcast %cst_66 : f32 to vector<2x32xf32>
    %260 = arith.addf %259, %258 : vector<2x32xf32>
    %261 = arith.divf %259, %260 : vector<2x32xf32>
    %262 = vector.extract_strided_slice %249 {offsets = [0, 64], sizes = [2, 32], strides = [1, 1]} : vector<2x128xf32> to vector<2x32xf32>
    %263 = math.tanh %262 : vector<2x32xf32>
    %264 = vector.extract_strided_slice %249 {offsets = [0, 96], sizes = [2, 32], strides = [1, 1]} : vector<2x128xf32> to vector<2x32xf32>
    %265 = arith.negf %264 : vector<2x32xf32>
    %266 = math.exp %265 : vector<2x32xf32>
    %cst_67 = arith.constant 1.000000e+00 : f32
    %267 = vector.broadcast %cst_67 : f32 to vector<2x32xf32>
    %268 = arith.addf %267, %266 : vector<2x32xf32>
    %269 = arith.divf %267, %268 : vector<2x32xf32>
    %270 = arith.mulf %261, %203 : vector<2x32xf32>
    %271 = arith.mulf %255, %263 : vector<2x32xf32>
    %272 = arith.addf %270, %271 : vector<2x32xf32>
    %273 = math.tanh %272 : vector<2x32xf32>
    %274 = arith.mulf %269, %273 : vector<2x32xf32>
    %275 = arith.index_cast %244 : i32 to index
    %c0_68 = arith.constant 0 : index
    %c0_69 = arith.constant 0 : index
    %276 = vector.load %arg5[%275, %c0_68, %c0_69] : memref<8x2x32xf32, #tpu.memory_space<vmem>>, vector<1x2x32xf32>
    %277 = vector.shape_cast %276 : vector<1x2x32xf32> to vector<2x32xf32>
    %278 = vector.shape_cast %274 : vector<2x32xf32> to vector<1x2x32xf32>
    tpu.vector_store %arg5[%275, %c0_68, %c0_69], %278 {strides = array<i32>} : memref<8x2x32xf32, #tpu.memory_space<vmem>>, vector<1x2x32xf32>,
    %c4_i32 = arith.constant 4 : i32
    %279 = arith.index_cast %c4_i32 : i32 to index
    %c0_70 = arith.constant 0 : index
    %c0_71 = arith.constant 0 : index
    %280 = vector.load %arg0[%279, %c0_70, %c0_71] : memref<8x2x128xf32, #tpu.memory_space<vmem>>, vector<1x2x128xf32>
    %281 = vector.shape_cast %280 : vector<1x2x128xf32> to vector<2x128xf32>
    %cst_72 = arith.constant dense<0.000000e+00> : vector<2x128xf32>
    %282 = tpu.matmul %239, %0, %cst_72 {dimension_numbers = #tpu.dot_dimension_numbers<[1], [0], [0], [1], [0, 0, 1, 1], [], []>} : vector<2x32xf32>, vector<32x128xf32>, vector<2x128xf32> -> vector<2x128xf32>
    %283 = arith.addf %281, %282 : vector<2x128xf32>
    %284 = vector.extract_strided_slice %283 {offsets = [0, 0], sizes = [2, 32], strides = [1, 1]} : vector<2x128xf32> to vector<2x32xf32>
    %285 = arith.negf %284 : vector<2x32xf32>
    %286 = math.exp %285 : vector<2x32xf32>
    %cst_73 = arith.constant 1.000000e+00 : f32
    %287 = vector.broadcast %cst_73 : f32 to vector<2x32xf32>
    %288 = arith.addf %287, %286 : vector<2x32xf32>
    %289 = arith.divf %287, %288 : vector<2x32xf32>
    %290 = vector.extract_strided_slice %283 {offsets = [0, 32], sizes = [2, 32], strides = [1, 1]} : vector<2x128xf32> to vector<2x32xf32>
    %291 = arith.negf %290 : vector<2x32xf32>
    %292 = math.exp %291 : vector<2x32xf32>
    %cst_74 = arith.constant 1.000000e+00 : f32
    %293 = vector.broadcast %cst_74 : f32 to vector<2x32xf32>
    %294 = arith.addf %293, %292 : vector<2x32xf32>
    %295 = arith.divf %293, %294 : vector<2x32xf32>
    %296 = vector.extract_strided_slice %283 {offsets = [0, 64], sizes = [2, 32], strides = [1, 1]} : vector<2x128xf32> to vector<2x32xf32>
    %297 = math.tanh %296 : vector<2x32xf32>
    %298 = vector.extract_strided_slice %283 {offsets = [0, 96], sizes = [2, 32], strides = [1, 1]} : vector<2x128xf32> to vector<2x32xf32>
    %299 = arith.negf %298 : vector<2x32xf32>
    %300 = math.exp %299 : vector<2x32xf32>
    %cst_75 = arith.constant 1.000000e+00 : f32
    %301 = vector.broadcast %cst_75 : f32 to vector<2x32xf32>
    %302 = arith.addf %301, %300 : vector<2x32xf32>
    %303 = arith.divf %301, %302 : vector<2x32xf32>
    %304 = arith.mulf %295, %237 : vector<2x32xf32>
    %305 = arith.mulf %289, %297 : vector<2x32xf32>
    %306 = arith.addf %304, %305 : vector<2x32xf32>
    %307 = math.tanh %306 : vector<2x32xf32>
    %308 = arith.mulf %303, %307 : vector<2x32xf32>
    %309 = arith.index_cast %c4_i32 : i32 to index
    %c0_76 = arith.constant 0 : index
    %c0_77 = arith.constant 0 : index
    %310 = vector.load %arg4[%309, %c0_76, %c0_77] : memref<8x2x32xf32, #tpu.memory_space<vmem>>, vector<1x2x32xf32>
    %311 = vector.shape_cast %310 : vector<1x2x32xf32> to vector<2x32xf32>
    %312 = vector.shape_cast %308 : vector<2x32xf32> to vector<1x2x32xf32>
    tpu.vector_store %arg4[%309, %c0_76, %c0_77], %312 {strides = array<i32>} : memref<8x2x32xf32, #tpu.memory_space<vmem>>, vector<1x2x32xf32>,
    %c7_i32_78 = arith.constant 7 : i32
    %313 = arith.subi %c7_i32_78, %c4_i32 : i32
    %314 = arith.index_cast %313 : i32 to index
    %c0_79 = arith.constant 0 : index
    %c0_80 = arith.constant 0 : index
    %315 = vector.load %arg1[%314, %c0_79, %c0_80] : memref<8x2x128xf32, #tpu.memory_space<vmem>>, vector<1x2x128xf32>
    %316 = vector.shape_cast %315 : vector<1x2x128xf32> to vector<2x128xf32>
    %cst_81 = arith.constant dense<0.000000e+00> : vector<2x128xf32>
    %317 = tpu.matmul %274, %1, %cst_81 {dimension_numbers = #tpu.dot_dimension_numbers<[1], [0], [0], [1], [0, 0, 1, 1], [], []>} : vector<2x32xf32>, vector<32x128xf32>, vector<2x128xf32> -> vector<2x128xf32>
    %318 = arith.addf %316, %317 : vector<2x128xf32>
    %319 = vector.extract_strided_slice %318 {offsets = [0, 0], sizes = [2, 32], strides = [1, 1]} : vector<2x128xf32> to vector<2x32xf32>
    %320 = arith.negf %319 : vector<2x32xf32>
    %321 = math.exp %320 : vector<2x32xf32>
    %cst_82 = arith.constant 1.000000e+00 : f32
    %322 = vector.broadcast %cst_82 : f32 to vector<2x32xf32>
    %323 = arith.addf %322, %321 : vector<2x32xf32>
    %324 = arith.divf %322, %323 : vector<2x32xf32>
    %325 = vector.extract_strided_slice %318 {offsets = [0, 32], sizes = [2, 32], strides = [1, 1]} : vector<2x128xf32> to vector<2x32xf32>
    %326 = arith.negf %325 : vector<2x32xf32>
    %327 = math.exp %326 : vector<2x32xf32>
    %cst_83 = arith.constant 1.000000e+00 : f32
    %328 = vector.broadcast %cst_83 : f32 to vector<2x32xf32>
    %329 = arith.addf %328, %327 : vector<2x32xf32>
    %330 = arith.divf %328, %329 : vector<2x32xf32>
    %331 = vector.extract_strided_slice %318 {offsets = [0, 64], sizes = [2, 32], strides = [1, 1]} : vector<2x128xf32> to vector<2x32xf32>
    %332 = math.tanh %331 : vector<2x32xf32>
    %333 = vector.extract_strided_slice %318 {offsets = [0, 96], sizes = [2, 32], strides = [1, 1]} : vector<2x128xf32> to vector<2x32xf32>
    %334 = arith.negf %333 : vector<2x32xf32>
    %335 = math.exp %334 : vector<2x32xf32>
    %cst_84 = arith.constant 1.000000e+00 : f32
    %336 = vector.broadcast %cst_84 : f32 to vector<2x32xf32>
    %337 = arith.addf %336, %335 : vector<2x32xf32>
    %338 = arith.divf %336, %337 : vector<2x32xf32>
    %339 = arith.mulf %330, %272 : vector<2x32xf32>
    %340 = arith.mulf %324, %332 : vector<2x32xf32>
    %341 = arith.addf %339, %340 : vector<2x32xf32>
    %342 = math.tanh %341 : vector<2x32xf32>
    %343 = arith.mulf %338, %342 : vector<2x32xf32>
    %344 = arith.index_cast %313 : i32 to index
    %c0_85 = arith.constant 0 : index
    %c0_86 = arith.constant 0 : index
    %345 = vector.load %arg5[%344, %c0_85, %c0_86] : memref<8x2x32xf32, #tpu.memory_space<vmem>>, vector<1x2x32xf32>
    %346 = vector.shape_cast %345 : vector<1x2x32xf32> to vector<2x32xf32>
    %347 = vector.shape_cast %343 : vector<2x32xf32> to vector<1x2x32xf32>
    tpu.vector_store %arg5[%344, %c0_85, %c0_86], %347 {strides = array<i32>} : memref<8x2x32xf32, #tpu.memory_space<vmem>>, vector<1x2x32xf32>,
    %c5_i32 = arith.constant 5 : i32
    %348 = arith.index_cast %c5_i32 : i32 to index
    %c0_87 = arith.constant 0 : index
    %c0_88 = arith.constant 0 : index
    %349 = vector.load %arg0[%348, %c0_87, %c0_88] : memref<8x2x128xf32, #tpu.memory_space<vmem>>, vector<1x2x128xf32>
    %350 = vector.shape_cast %349 : vector<1x2x128xf32> to vector<2x128xf32>
    %cst_89 = arith.constant dense<0.000000e+00> : vector<2x128xf32>
    %351 = tpu.matmul %308, %0, %cst_89 {dimension_numbers = #tpu.dot_dimension_numbers<[1], [0], [0], [1], [0, 0, 1, 1], [], []>} : vector<2x32xf32>, vector<32x128xf32>, vector<2x128xf32> -> vector<2x128xf32>
    %352 = arith.addf %350, %351 : vector<2x128xf32>
    %353 = vector.extract_strided_slice %352 {offsets = [0, 0], sizes = [2, 32], strides = [1, 1]} : vector<2x128xf32> to vector<2x32xf32>
    %354 = arith.negf %353 : vector<2x32xf32>
    %355 = math.exp %354 : vector<2x32xf32>
    %cst_90 = arith.constant 1.000000e+00 : f32
    %356 = vector.broadcast %cst_90 : f32 to vector<2x32xf32>
    %357 = arith.addf %356, %355 : vector<2x32xf32>
    %358 = arith.divf %356, %357 : vector<2x32xf32>
    %359 = vector.extract_strided_slice %352 {offsets = [0, 32], sizes = [2, 32], strides = [1, 1]} : vector<2x128xf32> to vector<2x32xf32>
    %360 = arith.negf %359 : vector<2x32xf32>
    %361 = math.exp %360 : vector<2x32xf32>
    %cst_91 = arith.constant 1.000000e+00 : f32
    %362 = vector.broadcast %cst_91 : f32 to vector<2x32xf32>
    %363 = arith.addf %362, %361 : vector<2x32xf32>
    %364 = arith.divf %362, %363 : vector<2x32xf32>
    %365 = vector.extract_strided_slice %352 {offsets = [0, 64], sizes = [2, 32], strides = [1, 1]} : vector<2x128xf32> to vector<2x32xf32>
    %366 = math.tanh %365 : vector<2x32xf32>
    %367 = vector.extract_strided_slice %352 {offsets = [0, 96], sizes = [2, 32], strides = [1, 1]} : vector<2x128xf32> to vector<2x32xf32>
    %368 = arith.negf %367 : vector<2x32xf32>
    %369 = math.exp %368 : vector<2x32xf32>
    %cst_92 = arith.constant 1.000000e+00 : f32
    %370 = vector.broadcast %cst_92 : f32 to vector<2x32xf32>
    %371 = arith.addf %370, %369 : vector<2x32xf32>
    %372 = arith.divf %370, %371 : vector<2x32xf32>
    %373 = arith.mulf %364, %306 : vector<2x32xf32>
    %374 = arith.mulf %358, %366 : vector<2x32xf32>
    %375 = arith.addf %373, %374 : vector<2x32xf32>
    %376 = math.tanh %375 : vector<2x32xf32>
    %377 = arith.mulf %372, %376 : vector<2x32xf32>
    %378 = arith.index_cast %c5_i32 : i32 to index
    %c0_93 = arith.constant 0 : index
    %c0_94 = arith.constant 0 : index
    %379 = vector.load %arg4[%378, %c0_93, %c0_94] : memref<8x2x32xf32, #tpu.memory_space<vmem>>, vector<1x2x32xf32>
    %380 = vector.shape_cast %379 : vector<1x2x32xf32> to vector<2x32xf32>
    %381 = vector.shape_cast %377 : vector<2x32xf32> to vector<1x2x32xf32>
    tpu.vector_store %arg4[%378, %c0_93, %c0_94], %381 {strides = array<i32>} : memref<8x2x32xf32, #tpu.memory_space<vmem>>, vector<1x2x32xf32>,
    %c7_i32_95 = arith.constant 7 : i32
    %382 = arith.subi %c7_i32_95, %c5_i32 : i32
    %383 = arith.index_cast %382 : i32 to index
    %c0_96 = arith.constant 0 : index
    %c0_97 = arith.constant 0 : index
    %384 = vector.load %arg1[%383, %c0_96, %c0_97] : memref<8x2x128xf32, #tpu.memory_space<vmem>>, vector<1x2x128xf32>
    %385 = vector.shape_cast %384 : vector<1x2x128xf32> to vector<2x128xf32>
    %cst_98 = arith.constant dense<0.000000e+00> : vector<2x128xf32>
    %386 = tpu.matmul %343, %1, %cst_98 {dimension_numbers = #tpu.dot_dimension_numbers<[1], [0], [0], [1], [0, 0, 1, 1], [], []>} : vector<2x32xf32>, vector<32x128xf32>, vector<2x128xf32> -> vector<2x128xf32>
    %387 = arith.addf %385, %386 : vector<2x128xf32>
    %388 = vector.extract_strided_slice %387 {offsets = [0, 0], sizes = [2, 32], strides = [1, 1]} : vector<2x128xf32> to vector<2x32xf32>
    %389 = arith.negf %388 : vector<2x32xf32>
    %390 = math.exp %389 : vector<2x32xf32>
    %cst_99 = arith.constant 1.000000e+00 : f32
    %391 = vector.broadcast %cst_99 : f32 to vector<2x32xf32>
    %392 = arith.addf %391, %390 : vector<2x32xf32>
    %393 = arith.divf %391, %392 : vector<2x32xf32>
    %394 = vector.extract_strided_slice %387 {offsets = [0, 32], sizes = [2, 32], strides = [1, 1]} : vector<2x128xf32> to vector<2x32xf32>
    %395 = arith.negf %394 : vector<2x32xf32>
    %396 = math.exp %395 : vector<2x32xf32>
    %cst_100 = arith.constant 1.000000e+00 : f32
    %397 = vector.broadcast %cst_100 : f32 to vector<2x32xf32>
    %398 = arith.addf %397, %396 : vector<2x32xf32>
    %399 = arith.divf %397, %398 : vector<2x32xf32>
    %400 = vector.extract_strided_slice %387 {offsets = [0, 64], sizes = [2, 32], strides = [1, 1]} : vector<2x128xf32> to vector<2x32xf32>
    %401 = math.tanh %400 : vector<2x32xf32>
    %402 = vector.extract_strided_slice %387 {offsets = [0, 96], sizes = [2, 32], strides = [1, 1]} : vector<2x128xf32> to vector<2x32xf32>
    %403 = arith.negf %402 : vector<2x32xf32>
    %404 = math.exp %403 : vector<2x32xf32>
    %cst_101 = arith.constant 1.000000e+00 : f32
    %405 = vector.broadcast %cst_101 : f32 to vector<2x32xf32>
    %406 = arith.addf %405, %404 : vector<2x32xf32>
    %407 = arith.divf %405, %406 : vector<2x32xf32>
    %408 = arith.mulf %399, %341 : vector<2x32xf32>
    %409 = arith.mulf %393, %401 : vector<2x32xf32>
    %410 = arith.addf %408, %409 : vector<2x32xf32>
    %411 = math.tanh %410 : vector<2x32xf32>
    %412 = arith.mulf %407, %411 : vector<2x32xf32>
    %413 = arith.index_cast %382 : i32 to index
    %c0_102 = arith.constant 0 : index
    %c0_103 = arith.constant 0 : index
    %414 = vector.load %arg5[%413, %c0_102, %c0_103] : memref<8x2x32xf32, #tpu.memory_space<vmem>>, vector<1x2x32xf32>
    %415 = vector.shape_cast %414 : vector<1x2x32xf32> to vector<2x32xf32>
    %416 = vector.shape_cast %412 : vector<2x32xf32> to vector<1x2x32xf32>
    tpu.vector_store %arg5[%413, %c0_102, %c0_103], %416 {strides = array<i32>} : memref<8x2x32xf32, #tpu.memory_space<vmem>>, vector<1x2x32xf32>,
    %c6_i32 = arith.constant 6 : i32
    %417 = arith.index_cast %c6_i32 : i32 to index
    %c0_104 = arith.constant 0 : index
    %c0_105 = arith.constant 0 : index
    %418 = vector.load %arg0[%417, %c0_104, %c0_105] : memref<8x2x128xf32, #tpu.memory_space<vmem>>, vector<1x2x128xf32>
    %419 = vector.shape_cast %418 : vector<1x2x128xf32> to vector<2x128xf32>
    %cst_106 = arith.constant dense<0.000000e+00> : vector<2x128xf32>
    %420 = tpu.matmul %377, %0, %cst_106 {dimension_numbers = #tpu.dot_dimension_numbers<[1], [0], [0], [1], [0, 0, 1, 1], [], []>} : vector<2x32xf32>, vector<32x128xf32>, vector<2x128xf32> -> vector<2x128xf32>
    %421 = arith.addf %419, %420 : vector<2x128xf32>
    %422 = vector.extract_strided_slice %421 {offsets = [0, 0], sizes = [2, 32], strides = [1, 1]} : vector<2x128xf32> to vector<2x32xf32>
    %423 = arith.negf %422 : vector<2x32xf32>
    %424 = math.exp %423 : vector<2x32xf32>
    %cst_107 = arith.constant 1.000000e+00 : f32
    %425 = vector.broadcast %cst_107 : f32 to vector<2x32xf32>
    %426 = arith.addf %425, %424 : vector<2x32xf32>
    %427 = arith.divf %425, %426 : vector<2x32xf32>
    %428 = vector.extract_strided_slice %421 {offsets = [0, 32], sizes = [2, 32], strides = [1, 1]} : vector<2x128xf32> to vector<2x32xf32>
    %429 = arith.negf %428 : vector<2x32xf32>
    %430 = math.exp %429 : vector<2x32xf32>
    %cst_108 = arith.constant 1.000000e+00 : f32
    %431 = vector.broadcast %cst_108 : f32 to vector<2x32xf32>
    %432 = arith.addf %431, %430 : vector<2x32xf32>
    %433 = arith.divf %431, %432 : vector<2x32xf32>
    %434 = vector.extract_strided_slice %421 {offsets = [0, 64], sizes = [2, 32], strides = [1, 1]} : vector<2x128xf32> to vector<2x32xf32>
    %435 = math.tanh %434 : vector<2x32xf32>
    %436 = vector.extract_strided_slice %421 {offsets = [0, 96], sizes = [2, 32], strides = [1, 1]} : vector<2x128xf32> to vector<2x32xf32>
    %437 = arith.negf %436 : vector<2x32xf32>
    %438 = math.exp %437 : vector<2x32xf32>
    %cst_109 = arith.constant 1.000000e+00 : f32
    %439 = vector.broadcast %cst_109 : f32 to vector<2x32xf32>
    %440 = arith.addf %439, %438 : vector<2x32xf32>
    %441 = arith.divf %439, %440 : vector<2x32xf32>
    %442 = arith.mulf %433, %375 : vector<2x32xf32>
    %443 = arith.mulf %427, %435 : vector<2x32xf32>
    %444 = arith.addf %442, %443 : vector<2x32xf32>
    %445 = math.tanh %444 : vector<2x32xf32>
    %446 = arith.mulf %441, %445 : vector<2x32xf32>
    %447 = arith.index_cast %c6_i32 : i32 to index
    %c0_110 = arith.constant 0 : index
    %c0_111 = arith.constant 0 : index
    %448 = vector.load %arg4[%447, %c0_110, %c0_111] : memref<8x2x32xf32, #tpu.memory_space<vmem>>, vector<1x2x32xf32>
    %449 = vector.shape_cast %448 : vector<1x2x32xf32> to vector<2x32xf32>
    %450 = vector.shape_cast %446 : vector<2x32xf32> to vector<1x2x32xf32>
    tpu.vector_store %arg4[%447, %c0_110, %c0_111], %450 {strides = array<i32>} : memref<8x2x32xf32, #tpu.memory_space<vmem>>, vector<1x2x32xf32>,
    %c7_i32_112 = arith.constant 7 : i32
    %451 = arith.subi %c7_i32_112, %c6_i32 : i32
    %452 = arith.index_cast %451 : i32 to index
    %c0_113 = arith.constant 0 : index
    %c0_114 = arith.constant 0 : index
    %453 = vector.load %arg1[%452, %c0_113, %c0_114] : memref<8x2x128xf32, #tpu.memory_space<vmem>>, vector<1x2x128xf32>
    %454 = vector.shape_cast %453 : vector<1x2x128xf32> to vector<2x128xf32>
    %cst_115 = arith.constant dense<0.000000e+00> : vector<2x128xf32>
    %455 = tpu.matmul %412, %1, %cst_115 {dimension_numbers = #tpu.dot_dimension_numbers<[1], [0], [0], [1], [0, 0, 1, 1], [], []>} : vector<2x32xf32>, vector<32x128xf32>, vector<2x128xf32> -> vector<2x128xf32>
    %456 = arith.addf %454, %455 : vector<2x128xf32>
    %457 = vector.extract_strided_slice %456 {offsets = [0, 0], sizes = [2, 32], strides = [1, 1]} : vector<2x128xf32> to vector<2x32xf32>
    %458 = arith.negf %457 : vector<2x32xf32>
    %459 = math.exp %458 : vector<2x32xf32>
    %cst_116 = arith.constant 1.000000e+00 : f32
    %460 = vector.broadcast %cst_116 : f32 to vector<2x32xf32>
    %461 = arith.addf %460, %459 : vector<2x32xf32>
    %462 = arith.divf %460, %461 : vector<2x32xf32>
    %463 = vector.extract_strided_slice %456 {offsets = [0, 32], sizes = [2, 32], strides = [1, 1]} : vector<2x128xf32> to vector<2x32xf32>
    %464 = arith.negf %463 : vector<2x32xf32>
    %465 = math.exp %464 : vector<2x32xf32>
    %cst_117 = arith.constant 1.000000e+00 : f32
    %466 = vector.broadcast %cst_117 : f32 to vector<2x32xf32>
    %467 = arith.addf %466, %465 : vector<2x32xf32>
    %468 = arith.divf %466, %467 : vector<2x32xf32>
    %469 = vector.extract_strided_slice %456 {offsets = [0, 64], sizes = [2, 32], strides = [1, 1]} : vector<2x128xf32> to vector<2x32xf32>
    %470 = math.tanh %469 : vector<2x32xf32>
    %471 = vector.extract_strided_slice %456 {offsets = [0, 96], sizes = [2, 32], strides = [1, 1]} : vector<2x128xf32> to vector<2x32xf32>
    %472 = arith.negf %471 : vector<2x32xf32>
    %473 = math.exp %472 : vector<2x32xf32>
    %cst_118 = arith.constant 1.000000e+00 : f32
    %474 = vector.broadcast %cst_118 : f32 to vector<2x32xf32>
    %475 = arith.addf %474, %473 : vector<2x32xf32>
    %476 = arith.divf %474, %475 : vector<2x32xf32>
    %477 = arith.mulf %468, %410 : vector<2x32xf32>
    %478 = arith.mulf %462, %470 : vector<2x32xf32>
    %479 = arith.addf %477, %478 : vector<2x32xf32>
    %480 = math.tanh %479 : vector<2x32xf32>
    %481 = arith.mulf %476, %480 : vector<2x32xf32>
    %482 = arith.index_cast %451 : i32 to index
    %c0_119 = arith.constant 0 : index
    %c0_120 = arith.constant 0 : index
    %483 = vector.load %arg5[%482, %c0_119, %c0_120] : memref<8x2x32xf32, #tpu.memory_space<vmem>>, vector<1x2x32xf32>
    %484 = vector.shape_cast %483 : vector<1x2x32xf32> to vector<2x32xf32>
    %485 = vector.shape_cast %481 : vector<2x32xf32> to vector<1x2x32xf32>
    tpu.vector_store %arg5[%482, %c0_119, %c0_120], %485 {strides = array<i32>} : memref<8x2x32xf32, #tpu.memory_space<vmem>>, vector<1x2x32xf32>,
    %c7_i32_121 = arith.constant 7 : i32
    %486 = arith.index_cast %c7_i32_121 : i32 to index
    %c0_122 = arith.constant 0 : index
    %c0_123 = arith.constant 0 : index
    %487 = vector.load %arg0[%486, %c0_122, %c0_123] : memref<8x2x128xf32, #tpu.memory_space<vmem>>, vector<1x2x128xf32>
    %488 = vector.shape_cast %487 : vector<1x2x128xf32> to vector<2x128xf32>
    %cst_124 = arith.constant dense<0.000000e+00> : vector<2x128xf32>
    %489 = tpu.matmul %446, %0, %cst_124 {dimension_numbers = #tpu.dot_dimension_numbers<[1], [0], [0], [1], [0, 0, 1, 1], [], []>} : vector<2x32xf32>, vector<32x128xf32>, vector<2x128xf32> -> vector<2x128xf32>
    %490 = arith.addf %488, %489 : vector<2x128xf32>
    %491 = vector.extract_strided_slice %490 {offsets = [0, 0], sizes = [2, 32], strides = [1, 1]} : vector<2x128xf32> to vector<2x32xf32>
    %492 = arith.negf %491 : vector<2x32xf32>
    %493 = math.exp %492 : vector<2x32xf32>
    %cst_125 = arith.constant 1.000000e+00 : f32
    %494 = vector.broadcast %cst_125 : f32 to vector<2x32xf32>
    %495 = arith.addf %494, %493 : vector<2x32xf32>
    %496 = arith.divf %494, %495 : vector<2x32xf32>
    %497 = vector.extract_strided_slice %490 {offsets = [0, 32], sizes = [2, 32], strides = [1, 1]} : vector<2x128xf32> to vector<2x32xf32>
    %498 = arith.negf %497 : vector<2x32xf32>
    %499 = math.exp %498 : vector<2x32xf32>
    %cst_126 = arith.constant 1.000000e+00 : f32
    %500 = vector.broadcast %cst_126 : f32 to vector<2x32xf32>
    %501 = arith.addf %500, %499 : vector<2x32xf32>
    %502 = arith.divf %500, %501 : vector<2x32xf32>
    %503 = vector.extract_strided_slice %490 {offsets = [0, 64], sizes = [2, 32], strides = [1, 1]} : vector<2x128xf32> to vector<2x32xf32>
    %504 = math.tanh %503 : vector<2x32xf32>
    %505 = vector.extract_strided_slice %490 {offsets = [0, 96], sizes = [2, 32], strides = [1, 1]} : vector<2x128xf32> to vector<2x32xf32>
    %506 = arith.negf %505 : vector<2x32xf32>
    %507 = math.exp %506 : vector<2x32xf32>
    %cst_127 = arith.constant 1.000000e+00 : f32
    %508 = vector.broadcast %cst_127 : f32 to vector<2x32xf32>
    %509 = arith.addf %508, %507 : vector<2x32xf32>
    %510 = arith.divf %508, %509 : vector<2x32xf32>
    %511 = arith.mulf %502, %444 : vector<2x32xf32>
    %512 = arith.mulf %496, %504 : vector<2x32xf32>
    %513 = arith.addf %511, %512 : vector<2x32xf32>
    %514 = math.tanh %513 : vector<2x32xf32>
    %515 = arith.mulf %510, %514 : vector<2x32xf32>
    %516 = arith.index_cast %c7_i32_121 : i32 to index
    %c0_128 = arith.constant 0 : index
    %c0_129 = arith.constant 0 : index
    %517 = vector.load %arg4[%516, %c0_128, %c0_129] : memref<8x2x32xf32, #tpu.memory_space<vmem>>, vector<1x2x32xf32>
    %518 = vector.shape_cast %517 : vector<1x2x32xf32> to vector<2x32xf32>
    %519 = vector.shape_cast %515 : vector<2x32xf32> to vector<1x2x32xf32>
    tpu.vector_store %arg4[%516, %c0_128, %c0_129], %519 {strides = array<i32>} : memref<8x2x32xf32, #tpu.memory_space<vmem>>, vector<1x2x32xf32>,
    %c7_i32_130 = arith.constant 7 : i32
    %520 = arith.subi %c7_i32_130, %c7_i32_121 : i32
    %521 = arith.index_cast %520 : i32 to index
    %c0_131 = arith.constant 0 : index
    %c0_132 = arith.constant 0 : index
    %522 = vector.load %arg1[%521, %c0_131, %c0_132] : memref<8x2x128xf32, #tpu.memory_space<vmem>>, vector<1x2x128xf32>
    %523 = vector.shape_cast %522 : vector<1x2x128xf32> to vector<2x128xf32>
    %cst_133 = arith.constant dense<0.000000e+00> : vector<2x128xf32>
    %524 = tpu.matmul %481, %1, %cst_133 {dimension_numbers = #tpu.dot_dimension_numbers<[1], [0], [0], [1], [0, 0, 1, 1], [], []>} : vector<2x32xf32>, vector<32x128xf32>, vector<2x128xf32> -> vector<2x128xf32>
    %525 = arith.addf %523, %524 : vector<2x128xf32>
    %526 = vector.extract_strided_slice %525 {offsets = [0, 0], sizes = [2, 32], strides = [1, 1]} : vector<2x128xf32> to vector<2x32xf32>
    %527 = arith.negf %526 : vector<2x32xf32>
    %528 = math.exp %527 : vector<2x32xf32>
    %cst_134 = arith.constant 1.000000e+00 : f32
    %529 = vector.broadcast %cst_134 : f32 to vector<2x32xf32>
    %530 = arith.addf %529, %528 : vector<2x32xf32>
    %531 = arith.divf %529, %530 : vector<2x32xf32>
    %532 = vector.extract_strided_slice %525 {offsets = [0, 32], sizes = [2, 32], strides = [1, 1]} : vector<2x128xf32> to vector<2x32xf32>
    %533 = arith.negf %532 : vector<2x32xf32>
    %534 = math.exp %533 : vector<2x32xf32>
    %cst_135 = arith.constant 1.000000e+00 : f32
    %535 = vector.broadcast %cst_135 : f32 to vector<2x32xf32>
    %536 = arith.addf %535, %534 : vector<2x32xf32>
    %537 = arith.divf %535, %536 : vector<2x32xf32>
    %538 = vector.extract_strided_slice %525 {offsets = [0, 64], sizes = [2, 32], strides = [1, 1]} : vector<2x128xf32> to vector<2x32xf32>
    %539 = math.tanh %538 : vector<2x32xf32>
    %540 = vector.extract_strided_slice %525 {offsets = [0, 96], sizes = [2, 32], strides = [1, 1]} : vector<2x128xf32> to vector<2x32xf32>
    %541 = arith.negf %540 : vector<2x32xf32>
    %542 = math.exp %541 : vector<2x32xf32>
    %cst_136 = arith.constant 1.000000e+00 : f32
    %543 = vector.broadcast %cst_136 : f32 to vector<2x32xf32>
    %544 = arith.addf %543, %542 : vector<2x32xf32>
    %545 = arith.divf %543, %544 : vector<2x32xf32>
    %546 = arith.mulf %537, %479 : vector<2x32xf32>
    %547 = arith.mulf %531, %539 : vector<2x32xf32>
    %548 = arith.addf %546, %547 : vector<2x32xf32>
    %549 = math.tanh %548 : vector<2x32xf32>
    %550 = arith.mulf %545, %549 : vector<2x32xf32>
    %551 = arith.index_cast %520 : i32 to index
    %c0_137 = arith.constant 0 : index
    %c0_138 = arith.constant 0 : index
    %552 = vector.load %arg5[%551, %c0_137, %c0_138] : memref<8x2x32xf32, #tpu.memory_space<vmem>>, vector<1x2x32xf32>
    %553 = vector.shape_cast %552 : vector<1x2x32xf32> to vector<2x32xf32>
    %554 = vector.shape_cast %550 : vector<2x32xf32> to vector<1x2x32xf32>
    tpu.vector_store %arg5[%551, %c0_137, %c0_138], %554 {strides = array<i32>} : memref<8x2x32xf32, #tpu.memory_space<vmem>>, vector<1x2x32xf32>,
    %c8_i32 = arith.constant 8 : i32
    %c0_139 = arith.constant 0 : index
    %c0_140 = arith.constant 0 : index
    %c0_141 = arith.constant 0 : index
    %555 = vector.load %arg6[%c0_139, %c0_140, %c0_141] : memref<2x2x32xf32, #tpu.memory_space<vmem>>, vector<1x2x32xf32>
    %556 = vector.shape_cast %555 : vector<1x2x32xf32> to vector<2x32xf32>
    %557 = vector.shape_cast %515 : vector<2x32xf32> to vector<1x2x32xf32>
    tpu.vector_store %arg6[%c0_139, %c0_140, %c0_141], %557 {strides = array<i32>} : memref<2x2x32xf32, #tpu.memory_space<vmem>>, vector<1x2x32xf32>,
    %c1 = arith.constant 1 : index
    %c0_142 = arith.constant 0 : index
    %c0_143 = arith.constant 0 : index
    %558 = vector.load %arg6[%c1, %c0_142, %c0_143] : memref<2x2x32xf32, #tpu.memory_space<vmem>>, vector<1x2x32xf32>
    %559 = vector.shape_cast %558 : vector<1x2x32xf32> to vector<2x32xf32>
    %560 = vector.shape_cast %550 : vector<2x32xf32> to vector<1x2x32xf32>
    tpu.vector_store %arg6[%c1, %c0_142, %c0_143], %560 {strides = array<i32>} : memref<2x2x32xf32, #tpu.memory_space<vmem>>, vector<1x2x32xf32>,
    %c0_144 = arith.constant 0 : index
    %c0_145 = arith.constant 0 : index
    %c0_146 = arith.constant 0 : index
    %561 = vector.load %arg7[%c0_144, %c0_145, %c0_146] : memref<2x2x32xf32, #tpu.memory_space<vmem>>, vector<1x2x32xf32>
    %562 = vector.shape_cast %561 : vector<1x2x32xf32> to vector<2x32xf32>
    %563 = vector.shape_cast %513 : vector<2x32xf32> to vector<1x2x32xf32>
    tpu.vector_store %arg7[%c0_144, %c0_145, %c0_146], %563 {strides = array<i32>} : memref<2x2x32xf32, #tpu.memory_space<vmem>>, vector<1x2x32xf32>,
    %c1_147 = arith.constant 1 : index
    %c0_148 = arith.constant 0 : index
    %c0_149 = arith.constant 0 : index
    %564 = vector.load %arg7[%c1_147, %c0_148, %c0_149] : memref<2x2x32xf32, #tpu.memory_space<vmem>>, vector<1x2x32xf32>
    %565 = vector.shape_cast %564 : vector<1x2x32xf32> to vector<2x32xf32>
    %566 = vector.shape_cast %548 : vector<2x32xf32> to vector<1x2x32xf32>
    tpu.vector_store %arg7[%c1_147, %c0_148, %c0_149], %566 {strides = array<i32>} : memref<2x2x32xf32, #tpu.memory_space<vmem>>, vector<1x2x32xf32>,
    return
  }
}

</mosaic_0001>

<llo_original>
// kernel: encoder_forward.1
$region0: #{encoder_forward.1}
  #allocation0 [shape = 'u32[]', space=smem, size = 0x4, offset = 0x4, fixed_abs, tag = 'smem constant byte address 0x4 - core index']
  #allocation1 [shape = 'u32[72,128]{1,0:T(1,128)}', space=vmem, size = 0x9000, scoped, tag = 'internal scratch']
  %s0 = inlined_call_operand.vmem [shape: f32[8,2,128], index: 0, kind: input, shape index: {}]
  %s1 = inlined_call_operand.vmem [shape: f32[8,2,128], index: 1, kind: input, shape index: {}]
  %s2 = inlined_call_operand.vmem [shape: f32[32,128], index: 2, kind: input, shape index: {}]
  %s3 = inlined_call_operand.vmem [shape: f32[32,128], index: 3, kind: input, shape index: {}]
  %s4 = inlined_call_operand.vmem [shape: f32[8,2,32], index: 4, kind: output, shape index: {0}]
  %s5 = inlined_call_operand.vmem [shape: f32[8,2,32], index: 5, kind: output, shape index: {1}]
  %s6 = inlined_call_operand.vmem [shape: f32[2,2,32], index: 6, kind: output, shape index: {2}]
  %s7 = inlined_call_operand.vmem [shape: f32[2,2,32], index: 7, kind: output, shape index: {3}]
  %8 = xla_tuple %s4, %s5, %s6, %s7
  %s9 = sld [smem:[#allocation0]]
  $region50: #{encoder_forward.1} parent=0
    _
  %s11 = ssub.s32 1, %s9
  %s12 = scalar_select 0, %s11, %s9
  // Predicated region
  $region2: #{encoder_forward.1} parent=0 // pred_check
    _
  $region3: #{encoder_forward.1} parent=0 // pred_check_branch
    %14 = sbr.rel (0) target = $region5
  $region4: #{encoder_forward.1} parent=0 // pred_region
    _
  $region5: #{encoder_forward.1} parent=0 // pred_fallthru
    _
  // Predicated region
  $region6: #{encoder_forward.1} parent=0 // pred_check
    _
  $region7: #{encoder_forward.1} parent=0 // pred_check_branch
    %16 = sbr.rel (0) target = $region9
  $region8: #{encoder_forward.1} parent=0 // pred_region
    _
  $region9: #{encoder_forward.1} parent=0 // pred_fallthru
    _
  // Predicated region
  $region10: #{encoder_forward.1} parent=0 // pred_check
    _
  $region11: #{encoder_forward.1} parent=0 // pred_check_branch
    %18 = sbr.rel (0) target = $region13
  $region12: #{encoder_forward.1} parent=0 // pred_region
    _
  $region13: #{encoder_forward.1} parent=0 // pred_fallthru
    _
  // Predicated region
  $region14: #{encoder_forward.1} parent=0 // pred_check
    _
  $region15: #{encoder_forward.1} parent=0 // pred_check_branch
    %20 = sbr.rel (0) target = $region17
  $region16: #{encoder_forward.1} parent=0 // pred_region
    _
  $region17: #{encoder_forward.1} parent=0 // pred_fallthru
    _
  %v21 = vld [vmem:[%s2] sm:$0xff]
  %v22 = vld [vmem:[%s2 + $0x8] sm:$0xff]
  %v23 = vld [vmem:[%s2 + $0x10] sm:$0xff]
  %v24 = vld [vmem:[%s2 + $0x18] sm:$0xff]
  %v25 = vld [vmem:[%s3] sm:$0xff]
  %v26 = vld [vmem:[%s3 + $0x8] sm:$0xff]
  %v27 = vld [vmem:[%s3 + $0x10] sm:$0xff]
  %v28 = vld [vmem:[%s3 + $0x18] sm:$0xff]
  %v29 = vld [vmem:[%s0] sm:$0x3]
  %vm30 = vcmask 261120
  %v32 = vsel %vm30, 0.0, 0
  %34 = vmatpush.msra.mxu0 0.0
  %35 = vmatpush.msra.mxu0 0.0
  %36 = vmatpush.msra.mxu0 0.0
  %37 = vmatpush.msra.mxu0 0.0
  %38 = vmatpush.msra.mxu0 0.0
  %39 = vmatpush.msra.mxu0 0.0
  %40 = vmatpush.msra.mxu0 0.0
  %41 = vmatpush.msra.mxu0 0.0
  %42 = vmatpush.msra.mxu0 0.0
  %43 = vmatpush.msra.mxu0 0.0
  %44 = vmatpush.msra.mxu0 0.0
  %45 = vmatpush.msra.mxu0 0.0
  %46 = vmatpush.msra.mxu0 %v24
  %47 = vmatpush.msra.mxu0 %v23
  %48 = vmatpush.msra.mxu0 %v22
  %49 = vmatpush.msra.mxu0 %v21
  %50 = vmatmul.f32.gmra.mxu0 %v32
  %v51 = vpop.f32.mrf.mxu0
  %v52 = vadd.f32 0.0, %v51
  %53 = vdwg.mxu0
  %v54 = vadd.f32 %v29, %v52
  %v55 = vxor.u32 %v54, 2147483648
  %v56 = vmul.f32 %v55, 1.442695
  %v57 = vpow.pop %v56
  %v58 = vadd.f32 %v57, 1.0
  %v59 = vrcp.pop %v58
  %v60 = vmul.f32 %v58, %v59
  %v61 = vsub.f32 1.0, %v60
  %v62 = vmul.f32 %v59, %v61
  %v63 = vadd.f32 %v59, %v62
  %vm64 = vweird.f32 %v58
  %vm65 = vweird.f32 %v59
  %vm66 = vmor %vm64, %vm65
  %v67 = vsel %vm66, %v59, %v63
  %v68 = vand.u32 2147483647, %v58
  %vm69 = vcmp.eq.f32.partialorder %v68, 8.507059e+37
  %v70 = vand.u32 %v58, 2147483648
  %v71 = vor.u32 1.1754944e-38, %v70
  %v72 = vsel %vm69, %v71, %v67
  %v73 = vmul.f32 1.0, %v72
  %v74 = vtanh.pop %v54
  %v75 = vmul.f32 %v73, 0.0
  %77 = vrot.lane.b32.xlu0 %v74, 64
  %v78 = vpop.permute.xlu0 %77
  %v80 = vmul.f32 %v73, %v78
  %82 = vrot.lane.b32.xlu0 %v80, 32
  %v83 = vpop.permute.xlu0 %82
  %v85 = vadd.f32 %v75, %v83
  %v86 = vtanh.pop %v85
  %88 = vrot.lane.b32.xlu0 %v86, 64
  %v89 = vpop.permute.xlu0 %88
  %v91 = vmul.f32 %v73, %v89
  %93 = vrot.lane.b32.xlu0 %v91, 32
  %v94 = vpop.permute.xlu0 %93
  %vm96 = vcmask 254976
  %97 = vst.msk [vmem:[%s4] sm:$0x3] %vm96, %v94
  %s98 = scalar_lea.vmem %s1, 14
  %v99 = vld [vmem:[%s98] sm:$0x3]
  %100 = vmatpush.msra.mxu0 0.0
  %101 = vmatpush.msra.mxu0 0.0
  %102 = vmatpush.msra.mxu0 0.0
  %103 = vmatpush.msra.mxu0 0.0
  %104 = vmatpush.msra.mxu0 0.0
  %105 = vmatpush.msra.mxu0 0.0
  %106 = vmatpush.msra.mxu0 0.0
  %107 = vmatpush.msra.mxu0 0.0
  %108 = vmatpush.msra.mxu0 0.0
  %109 = vmatpush.msra.mxu0 0.0
  %110 = vmatpush.msra.mxu0 0.0
  %111 = vmatpush.msra.mxu0 0.0
  %112 = vmatpush.msra.mxu0 %v28
  %113 = vmatpush.msra.mxu0 %v27
  %114 = vmatpush.msra.mxu0 %v26
  %115 = vmatpush.msra.mxu0 %v25
  %116 = vmatmul.f32.gmra.mxu0 %v32
  %v117 = vpop.f32.mrf.mxu0
  %v118 = vadd.f32 0.0, %v117
  %119 = vdwg.mxu0
  %v120 = vadd.f32 %v99, %v118
  %v121 = vxor.u32 %v120, 2147483648
  %v122 = vmul.f32 %v121, 1.442695
  %v123 = vpow.pop %v122
  %v124 = vadd.f32 %v123, 1.0
  %v125 = vrcp.pop %v124
  %v126 = vmul.f32 %v124, %v125
  %v127 = vsub.f32 1.0, %v126
  %v128 = vmul.f32 %v125, %v127
  %v129 = vadd.f32 %v125, %v128
  %vm130 = vweird.f32 %v124
  %vm131 = vweird.f32 %v125
  %vm132 = vmor %vm130, %vm131
  %v133 = vsel %vm132, %v125, %v129
  %v134 = vand.u32 2147483647, %v124
  %vm135 = vcmp.eq.f32.partialorder %v134, 8.507059e+37
  %v136 = vand.u32 %v124, 2147483648
  %v137 = vor.u32 1.1754944e-38, %v136
  %v138 = vsel %vm135, %v137, %v133
  %v139 = vmul.f32 1.0, %v138
  %v140 = vtanh.pop %v120
  %v141 = vmul.f32 %v139, 0.0
  %143 = vrot.lane.b32.xlu0 %v140, 64
  %v144 = vpop.permute.xlu0 %143
  %v146 = vmul.f32 %v139, %v144
  %148 = vrot.lane.b32.xlu0 %v146, 32
  %v149 = vpop.permute.xlu0 %148
  %v151 = vadd.f32 %v141, %v149
  %v152 = vtanh.pop %v151
  %154 = vrot.lane.b32.xlu0 %v152, 64
  %v155 = vpop.permute.xlu0 %154
  %v157 = vmul.f32 %v139, %v155
  %159 = vrot.lane.b32.xlu0 %v157, 32
  %v160 = vpop.permute.xlu0 %159
  %s162 = scalar_lea.vmem %s5, 14
  %163 = vst.msk [vmem:[%s162] sm:$0x3] %vm96, %v160
  %s164 = scalar_lea.vmem %s0, 2
  %v165 = vld [vmem:[%s164] sm:$0x3]
  %v166 = vsel %vm30, %v94, 0
  %168 = vmatpush.msra.mxu0 0.0
  %169 = vmatpush.msra.mxu0 0.0
  %170 = vmatpush.msra.mxu0 0.0
  %171 = vmatpush.msra.mxu0 0.0
  %172 = vmatpush.msra.mxu0 0.0
  %173 = vmatpush.msra.mxu0 0.0
  %174 = vmatpush.msra.mxu0 0.0
  %175 = vmatpush.msra.mxu0 0.0
  %176 = vmatpush.msra.mxu0 0.0
  %177 = vmatpush.msra.mxu0 0.0
  %178 = vmatpush.msra.mxu0 0.0
  %179 = vmatpush.msra.mxu0 0.0
  %180 = vmatpush.msra.mxu0 %v24
  %181 = vmatpush.msra.mxu0 %v23
  %182 = vmatpush.msra.mxu0 %v22
  %183 = vmatpush.msra.mxu0 %v21
  %184 = vmatmul.f32.gmra.mxu0 %v166
  %v185 = vpop.f32.mrf.mxu0
  %v186 = vadd.f32 0.0, %v185
  %187 = vdwg.mxu0
  %v188 = vadd.f32 %v165, %v186
  %v189 = vxor.u32 %v188, 2147483648
  %v190 = vmul.f32 %v189, 1.442695
  %v191 = vpow.pop %v190
  %v192 = vadd.f32 %v191, 1.0
  %v193 = vrcp.pop %v192
  %v194 = vmul.f32 %v192, %v193
  %v195 = vsub.f32 1.0, %v194
  %v196 = vmul.f32 %v193, %v195
  %v197 = vadd.f32 %v193, %v196
  %vm198 = vweird.f32 %v192
  %vm199 = vweird.f32 %v193
  %vm200 = vmor %vm198, %vm199
  %v201 = vsel %vm200, %v193, %v197
  %v202 = vand.u32 2147483647, %v192
  %vm203 = vcmp.eq.f32.partialorder %v202, 8.507059e+37
  %v204 = vand.u32 %v192, 2147483648
  %v205 = vor.u32 1.1754944e-38, %v204
  %v206 = vsel %vm203, %v205, %v201
  %v207 = vmul.f32 1.0, %v206
  %v208 = vtanh.pop %v188
  %v209 = vmul.f32 %v207, %v85
  %211 = vrot.lane.b32.xlu0 %v208, 64
  %v212 = vpop.permute.xlu0 %211
  %v214 = vmul.f32 %v207, %v212
  %216 = vrot.lane.b32.xlu0 %v214, 32
  %v217 = vpop.permute.xlu0 %216
  %v219 = vadd.f32 %v209, %v217
  %v220 = vtanh.pop %v219
  %222 = vrot.lane.b32.xlu0 %v220, 64
  %v223 = vpop.permute.xlu0 %222
  %v225 = vmul.f32 %v207, %v223
  %227 = vrot.lane.b32.xlu0 %v225, 32
  %v228 = vpop.permute.xlu0 %227
  %s230 = scalar_lea.vmem %s4, 2
  %231 = vst.msk [vmem:[%s230] sm:$0x3] %vm96, %v228
  %s232 = scalar_lea.vmem %s1, 12
  %v233 = vld [vmem:[%s232] sm:$0x3]
  %v234 = vsel %vm30, %v160, 0
  %236 = vmatpush.msra.mxu0 0.0
  %237 = vmatpush.msra.mxu0 0.0
  %238 = vmatpush.msra.mxu0 0.0
  %239 = vmatpush.msra.mxu0 0.0
  %240 = vmatpush.msra.mxu0 0.0
  %241 = vmatpush.msra.mxu0 0.0
  %242 = vmatpush.msra.mxu0 0.0
  %243 = vmatpush.msra.mxu0 0.0
  %244 = vmatpush.msra.mxu0 0.0
  %245 = vmatpush.msra.mxu0 0.0
  %246 = vmatpush.msra.mxu0 0.0
  %247 = vmatpush.msra.mxu0 0.0
  %248 = vmatpush.msra.mxu0 %v28
  %249 = vmatpush.msra.mxu0 %v27
  %250 = vmatpush.msra.mxu0 %v26
  %251 = vmatpush.msra.mxu0 %v25
  %252 = vmatmul.f32.gmra.mxu0 %v234
  %v253 = vpop.f32.mrf.mxu0
  %v254 = vadd.f32 0.0, %v253
  %255 = vdwg.mxu0
  %v256 = vadd.f32 %v233, %v254
  %v257 = vxor.u32 %v256, 2147483648
  %v258 = vmul.f32 %v257, 1.442695
  %v259 = vpow.pop %v258
  %v260 = vadd.f32 %v259, 1.0
  %v261 = vrcp.pop %v260
  %v262 = vmul.f32 %v260, %v261
  %v263 = vsub.f32 1.0, %v262
  %v264 = vmul.f32 %v261, %v263
  %v265 = vadd.f32 %v261, %v264
  %vm266 = vweird.f32 %v260
  %vm267 = vweird.f32 %v261
  %vm268 = vmor %vm266, %vm267
  %v269 = vsel %vm268, %v261, %v265
  %v270 = vand.u32 2147483647, %v260
  %vm271 = vcmp.eq.f32.partialorder %v270, 8.507059e+37
  %v272 = vand.u32 %v260, 2147483648
  %v273 = vor.u32 1.1754944e-38, %v272
  %v274 = vsel %vm271, %v273, %v269
  %v275 = vmul.f32 1.0, %v274
  %v276 = vtanh.pop %v256
  %v277 = vmul.f32 %v275, %v151
  %279 = vrot.lane.b32.xlu0 %v276, 64
  %v280 = vpop.permute.xlu0 %279
  %v282 = vmul.f32 %v275, %v280
  %284 = vrot.lane.b32.xlu0 %v282, 32
  %v285 = vpop.permute.xlu0 %284
  %v287 = vadd.f32 %v277, %v285
  %v288 = vtanh.pop %v287
  %290 = vrot.lane.b32.xlu0 %v288, 64
  %v291 = vpop.permute.xlu0 %290
  %v293 = vmul.f32 %v275, %v291
  %295 = vrot.lane.b32.xlu0 %v293, 32
  %v296 = vpop.permute.xlu0 %295
  %s298 = scalar_lea.vmem %s5, 12
  %299 = vst.msk [vmem:[%s298] sm:$0x3] %vm96, %v296
  %s300 = scalar_lea.vmem %s0, 4
  %v301 = vld [vmem:[%s300] sm:$0x3]
  %v302 = vsel %vm30, %v228, 0
  %304 = vmatpush.msra.mxu0 0.0
  %305 = vmatpush.msra.mxu0 0.0
  %306 = vmatpush.msra.mxu0 0.0
  %307 = vmatpush.msra.mxu0 0.0
  %308 = vmatpush.msra.mxu0 0.0
  %309 = vmatpush.msra.mxu0 0.0
  %310 = vmatpush.msra.mxu0 0.0
  %311 = vmatpush.msra.mxu0 0.0
  %312 = vmatpush.msra.mxu0 0.0
  %313 = vmatpush.msra.mxu0 0.0
  %314 = vmatpush.msra.mxu0 0.0
  %315 = vmatpush.msra.mxu0 0.0
  %316 = vmatpush.msra.mxu0 %v24
  %317 = vmatpush.msra.mxu0 %v23
  %318 = vmatpush.msra.mxu0 %v22
  %319 = vmatpush.msra.mxu0 %v21
  %320 = vmatmul.f32.gmra.mxu0 %v302
  %v321 = vpop.f32.mrf.mxu0
  %v322 = vadd.f32 0.0, %v321
  %323 = vdwg.mxu0
  %v324 = vadd.f32 %v301, %v322
  %v325 = vxor.u32 %v324, 2147483648
  %v326 = vmul.f32 %v325, 1.442695
  %v327 = vpow.pop %v326
  %v328 = vadd.f32 %v327, 1.0
  %v329 = vrcp.pop %v328
  %v330 = vmul.f32 %v328, %v329
  %v331 = vsub.f32 1.0, %v330
  %v332 = vmul.f32 %v329, %v331
  %v333 = vadd.f32 %v329, %v332
  %vm334 = vweird.f32 %v328
  %vm335 = vweird.f32 %v329
  %vm336 = vmor %vm334, %vm335
  %v337 = vsel %vm336, %v329, %v333
  %v338 = vand.u32 2147483647, %v328
  %vm339 = vcmp.eq.f32.partialorder %v338, 8.507059e+37
  %v340 = vand.u32 %v328, 2147483648
  %v341 = vor.u32 1.1754944e-38, %v340
  %v342 = vsel %vm339, %v341, %v337
  %v343 = vmul.f32 1.0, %v342
  %v344 = vtanh.pop %v324
  %v345 = vmul.f32 %v343, %v219
  %347 = vrot.lane.b32.xlu0 %v344, 64
  %v348 = vpop.permute.xlu0 %347
  %v350 = vmul.f32 %v343, %v348
  %352 = vrot.lane.b32.xlu0 %v350, 32
  %v353 = vpop.permute.xlu0 %352
  %v355 = vadd.f32 %v345, %v353
  %v356 = vtanh.pop %v355
  %358 = vrot.lane.b32.xlu0 %v356, 64
  %v359 = vpop.permute.xlu0 %358
  %v361 = vmul.f32 %v343, %v359
  %363 = vrot.lane.b32.xlu0 %v361, 32
  %v364 = vpop.permute.xlu0 %363
  %s366 = scalar_lea.vmem %s4, 4
  %367 = vst.msk [vmem:[%s366] sm:$0x3] %vm96, %v364
  %s368 = scalar_lea.vmem %s1, 10
  %v369 = vld [vmem:[%s368] sm:$0x3]
  %v370 = vsel %vm30, %v296, 0
  %372 = vmatpush.msra.mxu0 0.0
  %373 = vmatpush.msra.mxu0 0.0
  %374 = vmatpush.msra.mxu0 0.0
  %375 = vmatpush.msra.mxu0 0.0
  %376 = vmatpush.msra.mxu0 0.0
  %377 = vmatpush.msra.mxu0 0.0
  %378 = vmatpush.msra.mxu0 0.0
  %379 = vmatpush.msra.mxu0 0.0
  %380 = vmatpush.msra.mxu0 0.0
  %381 = vmatpush.msra.mxu0 0.0
  %382 = vmatpush.msra.mxu0 0.0
  %383 = vmatpush.msra.mxu0 0.0
  %384 = vmatpush.msra.mxu0 %v28
  %385 = vmatpush.msra.mxu0 %v27
  %386 = vmatpush.msra.mxu0 %v26
  %387 = vmatpush.msra.mxu0 %v25
  %388 = vmatmul.f32.gmra.mxu0 %v370
  %v389 = vpop.f32.mrf.mxu0
  %v390 = vadd.f32 0.0, %v389
  %391 = vdwg.mxu0
  %v392 = vadd.f32 %v369, %v390
  %v393 = vxor.u32 %v392, 2147483648
  %v394 = vmul.f32 %v393, 1.442695
  %v395 = vpow.pop %v394
  %v396 = vadd.f32 %v395, 1.0
  %v397 = vrcp.pop %v396
  %v398 = vmul.f32 %v396, %v397
  %v399 = vsub.f32 1.0, %v398
  %v400 = vmul.f32 %v397, %v399
  %v401 = vadd.f32 %v397, %v400
  %vm402 = vweird.f32 %v396
  %vm403 = vweird.f32 %v397
  %vm404 = vmor %vm402, %vm403
  %v405 = vsel %vm404, %v397, %v401
  %v406 = vand.u32 2147483647, %v396
  %vm407 = vcmp.eq.f32.partialorder %v406, 8.507059e+37
  %v408 = vand.u32 %v396, 2147483648
  %v409 = vor.u32 1.1754944e-38, %v408
  %v410 = vsel %vm407, %v409, %v405
  %v411 = vmul.f32 1.0, %v410
  %v412 = vtanh.pop %v392
  %v413 = vmul.f32 %v411, %v287
  %415 = vrot.lane.b32.xlu0 %v412, 64
  %v416 = vpop.permute.xlu0 %415
  %v418 = vmul.f32 %v411, %v416
  %420 = vrot.lane.b32.xlu0 %v418, 32
  %v421 = vpop.permute.xlu0 %420
  %v423 = vadd.f32 %v413, %v421
  %v424 = vtanh.pop %v423
  %426 = vrot.lane.b32.xlu0 %v424, 64
  %v427 = vpop.permute.xlu0 %426
  %v429 = vmul.f32 %v411, %v427
  %431 = vrot.lane.b32.xlu0 %v429, 32
  %v432 = vpop.permute.xlu0 %431
  %s434 = scalar_lea.vmem %s5, 10
  %435 = vst.msk [vmem:[%s434] sm:$0x3] %vm96, %v432
  %s436 = scalar_lea.vmem %s0, 6
  %v437 = vld [vmem:[%s436] sm:$0x3]
  %v438 = vsel %vm30, %v364, 0
  %440 = vmatpush.msra.mxu0 0.0
  %441 = vmatpush.msra.mxu0 0.0
  %442 = vmatpush.msra.mxu0 0.0
  %443 = vmatpush.msra.mxu0 0.0
  %444 = vmatpush.msra.mxu0 0.0
  %445 = vmatpush.msra.mxu0 0.0
  %446 = vmatpush.msra.mxu0 0.0
  %447 = vmatpush.msra.mxu0 0.0
  %448 = vmatpush.msra.mxu0 0.0
  %449 = vmatpush.msra.mxu0 0.0
  %450 = vmatpush.msra.mxu0 0.0
  %451 = vmatpush.msra.mxu0 0.0
  %452 = vmatpush.msra.mxu0 %v24
  %453 = vmatpush.msra.mxu0 %v23
  %454 = vmatpush.msra.mxu0 %v22
  %455 = vmatpush.msra.mxu0 %v21
  %456 = vmatmul.f32.gmra.mxu0 %v438
  %v457 = vpop.f32.mrf.mxu0
  %v458 = vadd.f32 0.0, %v457
  %459 = vdwg.mxu0
  %v460 = vadd.f32 %v437, %v458
  %v461 = vxor.u32 %v460, 2147483648
  %v462 = vmul.f32 %v461, 1.442695
  %v463 = vpow.pop %v462
  %v464 = vadd.f32 %v463, 1.0
  %v465 = vrcp.pop %v464
  %v466 = vmul.f32 %v464, %v465
  %v467 = vsub.f32 1.0, %v466
  %v468 = vmul.f32 %v465, %v467
  %v469 = vadd.f32 %v465, %v468
  %vm470 = vweird.f32 %v464
  %vm471 = vweird.f32 %v465
  %vm472 = vmor %vm470, %vm471
  %v473 = vsel %vm472, %v465, %v469
  %v474 = vand.u32 2147483647, %v464
  %vm475 = vcmp.eq.f32.partialorder %v474, 8.507059e+37
  %v476 = vand.u32 %v464, 2147483648
  %v477 = vor.u32 1.1754944e-38, %v476
  %v478 = vsel %vm475, %v477, %v473
  %v479 = vmul.f32 1.0, %v478
  %v480 = vtanh.pop %v460
  %v481 = vmul.f32 %v479, %v355
  %483 = vrot.lane.b32.xlu0 %v480, 64
  %v484 = vpop.permute.xlu0 %483
  %v486 = vmul.f32 %v479, %v484
  %488 = vrot.lane.b32.xlu0 %v486, 32
  %v489 = vpop.permute.xlu0 %488
  %v491 = vadd.f32 %v481, %v489
  %v492 = vtanh.pop %v491
  %494 = vrot.lane.b32.xlu0 %v492, 64
  %v495 = vpop.permute.xlu0 %494
  %v497 = vmul.f32 %v479, %v495
  %499 = vrot.lane.b32.xlu0 %v497, 32
  %v500 = vpop.permute.xlu0 %499
  %s502 = scalar_lea.vmem %s4, 6
  %503 = vst.msk [vmem:[%s502] sm:$0x3] %vm96, %v500
  %s504 = scalar_lea.vmem %s1, 8
  %v505 = vld [vmem:[%s504] sm:$0x3]
  %v506 = vsel %vm30, %v432, 0
  %508 = vmatpush.msra.mxu0 0.0
  %509 = vmatpush.msra.mxu0 0.0
  %510 = vmatpush.msra.mxu0 0.0
  %511 = vmatpush.msra.mxu0 0.0
  %512 = vmatpush.msra.mxu0 0.0
  %513 = vmatpush.msra.mxu0 0.0
  %514 = vmatpush.msra.mxu0 0.0
  %515 = vmatpush.msra.mxu0 0.0
  %516 = vmatpush.msra.mxu0 0.0
  %517 = vmatpush.msra.mxu0 0.0
  %518 = vmatpush.msra.mxu0 0.0
  %519 = vmatpush.msra.mxu0 0.0
  %520 = vmatpush.msra.mxu0 %v28
  %521 = vmatpush.msra.mxu0 %v27
  %522 = vmatpush.msra.mxu0 %v26
  %523 = vmatpush.msra.mxu0 %v25
  %524 = vmatmul.f32.gmra.mxu0 %v506
  %v525 = vpop.f32.mrf.mxu0
  %v526 = vadd.f32 0.0, %v525
  %527 = vdwg.mxu0
  %v528 = vadd.f32 %v505, %v526
  %v529 = vxor.u32 %v528, 2147483648
  %v530 = vmul.f32 %v529, 1.442695
  %v531 = vpow.pop %v530
  %v532 = vadd.f32 %v531, 1.0
  %v533 = vrcp.pop %v532
  %v534 = vmul.f32 %v532, %v533
  %v535 = vsub.f32 1.0, %v534
  %v536 = vmul.f32 %v533, %v535
  %v537 = vadd.f32 %v533, %v536
  %vm538 = vweird.f32 %v532
  %vm539 = vweird.f32 %v533
  %vm540 = vmor %vm538, %vm539
  %v541 = vsel %vm540, %v533, %v537
  %v542 = vand.u32 2147483647, %v532
  %vm543 = vcmp.eq.f32.partialorder %v542, 8.507059e+37
  %v544 = vand.u32 %v532, 2147483648
  %v545 = vor.u32 1.1754944e-38, %v544
  %v546 = vsel %vm543, %v545, %v541
  %v547 = vmul.f32 1.0, %v546
  %v548 = vtanh.pop %v528
  %v549 = vmul.f32 %v547, %v423
  %551 = vrot.lane.b32.xlu0 %v548, 64
  %v552 = vpop.permute.xlu0 %551
  %v554 = vmul.f32 %v547, %v552
  %556 = vrot.lane.b32.xlu0 %v554, 32
  %v557 = vpop.permute.xlu0 %556
  %v559 = vadd.f32 %v549, %v557
  %v560 = vtanh.pop %v559
  %562 = vrot.lane.b32.xlu0 %v560, 64
  %v563 = vpop.permute.xlu0 %562
  %v565 = vmul.f32 %v547, %v563
  %567 = vrot.lane.b32.xlu0 %v565, 32
  %v568 = vpop.permute.xlu0 %567
  %s570 = scalar_lea.vmem %s5, 8
  %571 = vst.msk [vmem:[%s570] sm:$0x3] %vm96, %v568
  %s572 = scalar_lea.vmem %s0, 8
  %v573 = vld [vmem:[%s572] sm:$0x3]
  %v574 = vsel %vm30, %v500, 0
  %576 = vmatpush.msra.mxu0 0.0
  %577 = vmatpush.msra.mxu0 0.0
  %578 = vmatpush.msra.mxu0 0.0
  %579 = vmatpush.msra.mxu0 0.0
  %580 = vmatpush.msra.mxu0 0.0
  %581 = vmatpush.msra.mxu0 0.0
  %582 = vmatpush.msra.mxu0 0.0
  %583 = vmatpush.msra.mxu0 0.0
  %584 = vmatpush.msra.mxu0 0.0
  %585 = vmatpush.msra.mxu0 0.0
  %586 = vmatpush.msra.mxu0 0.0
  %587 = vmatpush.msra.mxu0 0.0
  %588 = vmatpush.msra.mxu0 %v24
  %589 = vmatpush.msra.mxu0 %v23
  %590 = vmatpush.msra.mxu0 %v22
  %591 = vmatpush.msra.mxu0 %v21
  %592 = vmatmul.f32.gmra.mxu0 %v574
  %v593 = vpop.f32.mrf.mxu0
  %v594 = vadd.f32 0.0, %v593
  %595 = vdwg.mxu0
  %v596 = vadd.f32 %v573, %v594
  %v597 = vxor.u32 %v596, 2147483648
  %v598 = vmul.f32 %v597, 1.442695
  %v599 = vpow.pop %v598
  %v600 = vadd.f32 %v599, 1.0
  %v601 = vrcp.pop %v600
  %v602 = vmul.f32 %v600, %v601
  %v603 = vsub.f32 1.0, %v602
  %v604 = vmul.f32 %v601, %v603
  %v605 = vadd.f32 %v601, %v604
  %vm606 = vweird.f32 %v600
  %vm607 = vweird.f32 %v601
  %vm608 = vmor %vm606, %vm607
  %v609 = vsel %vm608, %v601, %v605
  %v610 = vand.u32 2147483647, %v600
  %vm611 = vcmp.eq.f32.partialorder %v610, 8.507059e+37
  %v612 = vand.u32 %v600, 2147483648
  %v613 = vor.u32 1.1754944e-38, %v612
  %v614 = vsel %vm611, %v613, %v609
  %v615 = vmul.f32 1.0, %v614
  %v616 = vtanh.pop %v596
  %v617 = vmul.f32 %v615, %v491
  %619 = vrot.lane.b32.xlu0 %v616, 64
  %v620 = vpop.permute.xlu0 %619
  %v622 = vmul.f32 %v615, %v620
  %624 = vrot.lane.b32.xlu0 %v622, 32
  %v625 = vpop.permute.xlu0 %624
  %v627 = vadd.f32 %v617, %v625
  %v628 = vtanh.pop %v627
  %630 = vrot.lane.b32.xlu0 %v628, 64
  %v631 = vpop.permute.xlu0 %630
  %v633 = vmul.f32 %v615, %v631
  %635 = vrot.lane.b32.xlu0 %v633, 32
  %v636 = vpop.permute.xlu0 %635
  %s638 = scalar_lea.vmem %s4, 8
  %639 = vst.msk [vmem:[%s638] sm:$0x3] %vm96, %v636
  %s640 = scalar_lea.vmem %s1, 6
  %v641 = vld [vmem:[%s640] sm:$0x3]
  %v642 = vsel %vm30, %v568, 0
  %644 = vmatpush.msra.mxu0 0.0
  %645 = vmatpush.msra.mxu0 0.0
  %646 = vmatpush.msra.mxu0 0.0
  %647 = vmatpush.msra.mxu0 0.0
  %648 = vmatpush.msra.mxu0 0.0
  %649 = vmatpush.msra.mxu0 0.0
  %650 = vmatpush.msra.mxu0 0.0
  %651 = vmatpush.msra.mxu0 0.0
  %652 = vmatpush.msra.mxu0 0.0
  %653 = vmatpush.msra.mxu0 0.0
  %654 = vmatpush.msra.mxu0 0.0
  %655 = vmatpush.msra.mxu0 0.0
  %656 = vmatpush.msra.mxu0 %v28
  %657 = vmatpush.msra.mxu0 %v27
  %658 = vmatpush.msra.mxu0 %v26
  %659 = vmatpush.msra.mxu0 %v25
  %660 = vmatmul.f32.gmra.mxu0 %v642
  %v661 = vpop.f32.mrf.mxu0
  %v662 = vadd.f32 0.0, %v661
  %663 = vdwg.mxu0
  %v664 = vadd.f32 %v641, %v662
  %v665 = vxor.u32 %v664, 2147483648
  %v666 = vmul.f32 %v665, 1.442695
  %v667 = vpow.pop %v666
  %v668 = vadd.f32 %v667, 1.0
  %v669 = vrcp.pop %v668
  %v670 = vmul.f32 %v668, %v669
  %v671 = vsub.f32 1.0, %v670
  %v672 = vmul.f32 %v669, %v671
  %v673 = vadd.f32 %v669, %v672
  %vm674 = vweird.f32 %v668
  %vm675 = vweird.f32 %v669
  %vm676 = vmor %vm674, %vm675
  %v677 = vsel %vm676, %v669, %v673
  %v678 = vand.u32 2147483647, %v668
  %vm679 = vcmp.eq.f32.partialorder %v678, 8.507059e+37
  %v680 = vand.u32 %v668, 2147483648
  %v681 = vor.u32 1.1754944e-38, %v680
  %v682 = vsel %vm679, %v681, %v677
  %v683 = vmul.f32 1.0, %v682
  %v684 = vtanh.pop %v664
  %v685 = vmul.f32 %v683, %v559
  %687 = vrot.lane.b32.xlu0 %v684, 64
  %v688 = vpop.permute.xlu0 %687
  %v690 = vmul.f32 %v683, %v688
  %692 = vrot.lane.b32.xlu0 %v690, 32
  %v693 = vpop.permute.xlu0 %692
  %v695 = vadd.f32 %v685, %v693
  %v696 = vtanh.pop %v695
  %698 = vrot.lane.b32.xlu0 %v696, 64
  %v699 = vpop.permute.xlu0 %698
  %v701 = vmul.f32 %v683, %v699
  %703 = vrot.lane.b32.xlu0 %v701, 32
  %v704 = vpop.permute.xlu0 %703
  %s706 = scalar_lea.vmem %s5, 6
  %707 = vst.msk [vmem:[%s706] sm:$0x3] %vm96, %v704
  %s708 = scalar_lea.vmem %s0, 10
  %v709 = vld [vmem:[%s708] sm:$0x3]
  %v710 = vsel %vm30, %v636, 0
  %712 = vmatpush.msra.mxu0 0.0
  %713 = vmatpush.msra.mxu0 0.0
  %714 = vmatpush.msra.mxu0 0.0
  %715 = vmatpush.msra.mxu0 0.0
  %716 = vmatpush.msra.mxu0 0.0
  %717 = vmatpush.msra.mxu0 0.0
  %718 = vmatpush.msra.mxu0 0.0
  %719 = vmatpush.msra.mxu0 0.0
  %720 = vmatpush.msra.mxu0 0.0
  %721 = vmatpush.msra.mxu0 0.0
  %722 = vmatpush.msra.mxu0 0.0
  %723 = vmatpush.msra.mxu0 0.0
  %724 = vmatpush.msra.mxu0 %v24
  %725 = vmatpush.msra.mxu0 %v23
  %726 = vmatpush.msra.mxu0 %v22
  %727 = vmatpush.msra.mxu0 %v21
  %728 = vmatmul.f32.gmra.mxu0 %v710
  %v729 = vpop.f32.mrf.mxu0
  %v730 = vadd.f32 0.0, %v729
  %731 = vdwg.mxu0
  %v732 = vadd.f32 %v709, %v730
  %v733 = vxor.u32 %v732, 2147483648
  %v734 = vmul.f32 %v733, 1.442695
  %v735 = vpow.pop %v734
  %v736 = vadd.f32 %v735, 1.0
  %v737 = vrcp.pop %v736
  %v738 = vmul.f32 %v736, %v737
  %v739 = vsub.f32 1.0, %v738
  %v740 = vmul.f32 %v737, %v739
  %v741 = vadd.f32 %v737, %v740
  %vm742 = vweird.f32 %v736
  %vm743 = vweird.f32 %v737
  %vm744 = vmor %vm742, %vm743
  %v745 = vsel %vm744, %v737, %v741
  %v746 = vand.u32 2147483647, %v736
  %vm747 = vcmp.eq.f32.partialorder %v746, 8.507059e+37
  %v748 = vand.u32 %v736, 2147483648
  %v749 = vor.u32 1.1754944e-38, %v748
  %v750 = vsel %vm747, %v749, %v745
  %v751 = vmul.f32 1.0, %v750
  %v752 = vtanh.pop %v732
  %v753 = vmul.f32 %v751, %v627
  %755 = vrot.lane.b32.xlu0 %v752, 64
  %v756 = vpop.permute.xlu0 %755
  %v758 = vmul.f32 %v751, %v756
  %760 = vrot.lane.b32.xlu0 %v758, 32
  %v761 = vpop.permute.xlu0 %760
  %v763 = vadd.f32 %v753, %v761
  %v764 = vtanh.pop %v763
  %766 = vrot.lane.b32.xlu0 %v764, 64
  %v767 = vpop.permute.xlu0 %766
  %v769 = vmul.f32 %v751, %v767
  %771 = vrot.lane.b32.xlu0 %v769, 32
  %v772 = vpop.permute.xlu0 %771
  %s774 = scalar_lea.vmem %s4, 10
  %775 = vst.msk [vmem:[%s774] sm:$0x3] %vm96, %v772
  %s776 = scalar_lea.vmem %s1, 4
  %v777 = vld [vmem:[%s776] sm:$0x3]
  %v778 = vsel %vm30, %v704, 0
  %780 = vmatpush.msra.mxu0 0.0
  %781 = vmatpush.msra.mxu0 0.0
  %782 = vmatpush.msra.mxu0 0.0
  %783 = vmatpush.msra.mxu0 0.0
  %784 = vmatpush.msra.mxu0 0.0
  %785 = vmatpush.msra.mxu0 0.0
  %786 = vmatpush.msra.mxu0 0.0
  %787 = vmatpush.msra.mxu0 0.0
  %788 = vmatpush.msra.mxu0 0.0
  %789 = vmatpush.msra.mxu0 0.0
  %790 = vmatpush.msra.mxu0 0.0
  %791 = vmatpush.msra.mxu0 0.0
  %792 = vmatpush.msra.mxu0 %v28
  %793 = vmatpush.msra.mxu0 %v27
  %794 = vmatpush.msra.mxu0 %v26
  %795 = vmatpush.msra.mxu0 %v25
  %796 = vmatmul.f32.gmra.mxu0 %v778
  %v797 = vpop.f32.mrf.mxu0
  %v798 = vadd.f32 0.0, %v797
  %799 = vdwg.mxu0
  %v800 = vadd.f32 %v777, %v798
  %v801 = vxor.u32 %v800, 2147483648
  %v802 = vmul.f32 %v801, 1.442695
  %v803 = vpow.pop %v802
  %v804 = vadd.f32 %v803, 1.0
  %v805 = vrcp.pop %v804
  %v806 = vmul.f32 %v804, %v805
  %v807 = vsub.f32 1.0, %v806
  %v808 = vmul.f32 %v805, %v807
  %v809 = vadd.f32 %v805, %v808
  %vm810 = vweird.f32 %v804
  %vm811 = vweird.f32 %v805
  %vm812 = vmor %vm810, %vm811
  %v813 = vsel %vm812, %v805, %v809
  %v814 = vand.u32 2147483647, %v804
  %vm815 = vcmp.eq.f32.partialorder %v814, 8.507059e+37
  %v816 = vand.u32 %v804, 2147483648
  %v817 = vor.u32 1.1754944e-38, %v816
  %v818 = vsel %vm815, %v817, %v813
  %v819 = vmul.f32 1.0, %v818
  %v820 = vtanh.pop %v800
  %v821 = vmul.f32 %v819, %v695
  %823 = vrot.lane.b32.xlu0 %v820, 64
  %v824 = vpop.permute.xlu0 %823
  %v826 = vmul.f32 %v819, %v824
  %828 = vrot.lane.b32.xlu0 %v826, 32
  %v829 = vpop.permute.xlu0 %828
  %v831 = vadd.f32 %v821, %v829
  %v832 = vtanh.pop %v831
  %834 = vrot.lane.b32.xlu0 %v832, 64
  %v835 = vpop.permute.xlu0 %834
  %v837 = vmul.f32 %v819, %v835
  %839 = vrot.lane.b32.xlu0 %v837, 32
  %v840 = vpop.permute.xlu0 %839
  %s842 = scalar_lea.vmem %s5, 4
  %843 = vst.msk [vmem:[%s842] sm:$0x3] %vm96, %v840
  %s844 = scalar_lea.vmem %s0, 12
  %v845 = vld [vmem:[%s844] sm:$0x3]
  %v846 = vsel %vm30, %v772, 0
  %848 = vmatpush.msra.mxu0 0.0
  %849 = vmatpush.msra.mxu0 0.0
  %850 = vmatpush.msra.mxu0 0.0
  %851 = vmatpush.msra.mxu0 0.0
  %852 = vmatpush.msra.mxu0 0.0
  %853 = vmatpush.msra.mxu0 0.0
  %854 = vmatpush.msra.mxu0 0.0
  %855 = vmatpush.msra.mxu0 0.0
  %856 = vmatpush.msra.mxu0 0.0
  %857 = vmatpush.msra.mxu0 0.0
  %858 = vmatpush.msra.mxu0 0.0
  %859 = vmatpush.msra.mxu0 0.0
  %860 = vmatpush.msra.mxu0 %v24
  %861 = vmatpush.msra.mxu0 %v23
  %862 = vmatpush.msra.mxu0 %v22
  %863 = vmatpush.msra.mxu0 %v21
  %864 = vmatmul.f32.gmra.mxu0 %v846
  %v865 = vpop.f32.mrf.mxu0
  %v866 = vadd.f32 0.0, %v865
  %867 = vdwg.mxu0
  %v868 = vadd.f32 %v845, %v866
  %v869 = vxor.u32 %v868, 2147483648
  %v870 = vmul.f32 %v869, 1.442695
  %v871 = vpow.pop %v870
  %v872 = vadd.f32 %v871, 1.0
  %v873 = vrcp.pop %v872
  %v874 = vmul.f32 %v872, %v873
  %v875 = vsub.f32 1.0, %v874
  %v876 = vmul.f32 %v873, %v875
  %v877 = vadd.f32 %v873, %v876
  %vm878 = vweird.f32 %v872
  %vm879 = vweird.f32 %v873
  %vm880 = vmor %vm878, %vm879
  %v881 = vsel %vm880, %v873, %v877
  %v882 = vand.u32 2147483647, %v872
  %vm883 = vcmp.eq.f32.partialorder %v882, 8.507059e+37
  %v884 = vand.u32 %v872, 2147483648
  %v885 = vor.u32 1.1754944e-38, %v884
  %v886 = vsel %vm883, %v885, %v881
  %v887 = vmul.f32 1.0, %v886
  %v888 = vtanh.pop %v868
  %v889 = vmul.f32 %v887, %v763
  %891 = vrot.lane.b32.xlu0 %v888, 64
  %v892 = vpop.permute.xlu0 %891
  %v894 = vmul.f32 %v887, %v892
  %896 = vrot.lane.b32.xlu0 %v894, 32
  %v897 = vpop.permute.xlu0 %896
  %v899 = vadd.f32 %v889, %v897
  %v900 = vtanh.pop %v899
  %902 = vrot.lane.b32.xlu0 %v900, 64
  %v903 = vpop.permute.xlu0 %902
  %v905 = vmul.f32 %v887, %v903
  %907 = vrot.lane.b32.xlu0 %v905, 32
  %v908 = vpop.permute.xlu0 %907
  %s910 = scalar_lea.vmem %s4, 12
  %911 = vst.msk [vmem:[%s910] sm:$0x3] %vm96, %v908
  %s912 = scalar_lea.vmem %s1, 2
  %v913 = vld [vmem:[%s912] sm:$0x3]
  %v914 = vsel %vm30, %v840, 0
  %916 = vmatpush.msra.mxu0 0.0
  %917 = vmatpush.msra.mxu0 0.0
  %918 = vmatpush.msra.mxu0 0.0
  %919 = vmatpush.msra.mxu0 0.0
  %920 = vmatpush.msra.mxu0 0.0
  %921 = vmatpush.msra.mxu0 0.0
  %922 = vmatpush.msra.mxu0 0.0
  %923 = vmatpush.msra.mxu0 0.0
  %924 = vmatpush.msra.mxu0 0.0
  %925 = vmatpush.msra.mxu0 0.0
  %926 = vmatpush.msra.mxu0 0.0
  %927 = vmatpush.msra.mxu0 0.0
  %928 = vmatpush.msra.mxu0 %v28
  %929 = vmatpush.msra.mxu0 %v27
  %930 = vmatpush.msra.mxu0 %v26
  %931 = vmatpush.msra.mxu0 %v25
  %932 = vmatmul.f32.gmra.mxu0 %v914
  %v933 = vpop.f32.mrf.mxu0
  %v934 = vadd.f32 0.0, %v933
  %935 = vdwg.mxu0
  %v936 = vadd.f32 %v913, %v934
  %v937 = vxor.u32 %v936, 2147483648
  %v938 = vmul.f32 %v937, 1.442695
  %v939 = vpow.pop %v938
  %v940 = vadd.f32 %v939, 1.0
  %v941 = vrcp.pop %v940
  %v942 = vmul.f32 %v940, %v941
  %v943 = vsub.f32 1.0, %v942
  %v944 = vmul.f32 %v941, %v943
  %v945 = vadd.f32 %v941, %v944
  %vm946 = vweird.f32 %v940
  %vm947 = vweird.f32 %v941
  %vm948 = vmor %vm946, %vm947
  %v949 = vsel %vm948, %v941, %v945
  %v950 = vand.u32 2147483647, %v940
  %vm951 = vcmp.eq.f32.partialorder %v950, 8.507059e+37
  %v952 = vand.u32 %v940, 2147483648
  %v953 = vor.u32 1.1754944e-38, %v952
  %v954 = vsel %vm951, %v953, %v949
  %v955 = vmul.f32 1.0, %v954
  %v956 = vtanh.pop %v936
  %v957 = vmul.f32 %v955, %v831
  %959 = vrot.lane.b32.xlu0 %v956, 64
  %v960 = vpop.permute.xlu0 %959
  %v962 = vmul.f32 %v955, %v960
  %964 = vrot.lane.b32.xlu0 %v962, 32
  %v965 = vpop.permute.xlu0 %964
  %v967 = vadd.f32 %v957, %v965
  %v968 = vtanh.pop %v967
  %970 = vrot.lane.b32.xlu0 %v968, 64
  %v971 = vpop.permute.xlu0 %970
  %v973 = vmul.f32 %v955, %v971
  %975 = vrot.lane.b32.xlu0 %v973, 32
  %v976 = vpop.permute.xlu0 %975
  %s978 = scalar_lea.vmem %s5, 2
  %979 = vst.msk [vmem:[%s978] sm:$0x3] %vm96, %v976
  %s980 = scalar_lea.vmem %s0, 14
  %v981 = vld [vmem:[%s980] sm:$0x3]
  %v982 = vsel %vm30, %v908, 0
  %984 = vmatpush.msra.mxu0 0.0
  %985 = vmatpush.msra.mxu0 0.0
  %986 = vmatpush.msra.mxu0 0.0
  %987 = vmatpush.msra.mxu0 0.0
  %988 = vmatpush.msra.mxu0 0.0
  %989 = vmatpush.msra.mxu0 0.0
  %990 = vmatpush.msra.mxu0 0.0
  %991 = vmatpush.msra.mxu0 0.0
  %992 = vmatpush.msra.mxu0 0.0
  %993 = vmatpush.msra.mxu0 0.0
  %994 = vmatpush.msra.mxu0 0.0
  %995 = vmatpush.msra.mxu0 0.0
  %996 = vmatpush.msra.mxu0 %v24
  %997 = vmatpush.msra.mxu0 %v23
  %998 = vmatpush.msra.mxu0 %v22
  %999 = vmatpush.msra.mxu0 %v21
  %1000 = vmatmul.f32.gmra.mxu0 %v982
  %v1001 = vpop.f32.mrf.mxu0
  %v1002 = vadd.f32 0.0, %v1001
  %1003 = vdwg.mxu0
  %v1004 = vadd.f32 %v981, %v1002
  %v1005 = vxor.u32 %v1004, 2147483648
  %v1006 = vmul.f32 %v1005, 1.442695
  %v1007 = vpow.pop %v1006
  %v1008 = vadd.f32 %v1007, 1.0
  %v1009 = vrcp.pop %v1008
  %v1010 = vmul.f32 %v1008, %v1009
  %v1011 = vsub.f32 1.0, %v1010
  %v1012 = vmul.f32 %v1009, %v1011
  %v1013 = vadd.f32 %v1009, %v1012
  %vm1014 = vweird.f32 %v1008
  %vm1015 = vweird.f32 %v1009
  %vm1016 = vmor %vm1014, %vm1015
  %v1017 = vsel %vm1016, %v1009, %v1013
  %v1018 = vand.u32 2147483647, %v1008
  %vm1019 = vcmp.eq.f32.partialorder %v1018, 8.507059e+37
  %v1020 = vand.u32 %v1008, 2147483648
  %v1021 = vor.u32 1.1754944e-38, %v1020
  %v1022 = vsel %vm1019, %v1021, %v1017
  %v1023 = vmul.f32 1.0, %v1022
  %v1024 = vtanh.pop %v1004
  %v1025 = vmul.f32 %v1023, %v899
  %1027 = vrot.lane.b32.xlu0 %v1024, 64
  %v1028 = vpop.permute.xlu0 %1027
  %v1030 = vmul.f32 %v1023, %v1028
  %1032 = vrot.lane.b32.xlu0 %v1030, 32
  %v1033 = vpop.permute.xlu0 %1032
  %v1035 = vadd.f32 %v1025, %v1033
  %v1036 = vtanh.pop %v1035
  %1038 = vrot.lane.b32.xlu0 %v1036, 64
  %v1039 = vpop.permute.xlu0 %1038
  %v1041 = vmul.f32 %v1023, %v1039
  %1043 = vrot.lane.b32.xlu0 %v1041, 32
  %v1044 = vpop.permute.xlu0 %1043
  %s1046 = scalar_lea.vmem %s4, 14
  %1047 = vst.msk [vmem:[%s1046] sm:$0x3] %vm96, %v1044
  %v1048 = vld [vmem:[%s1] sm:$0x3]
  %v1049 = vsel %vm30, %v976, 0
  %1051 = vmatpush.msra.mxu0 0.0
  %1052 = vmatpush.msra.mxu0 0.0
  %1053 = vmatpush.msra.mxu0 0.0
  %1054 = vmatpush.msra.mxu0 0.0
  %1055 = vmatpush.msra.mxu0 0.0
  %1056 = vmatpush.msra.mxu0 0.0
  %1057 = vmatpush.msra.mxu0 0.0
  %1058 = vmatpush.msra.mxu0 0.0
  %1059 = vmatpush.msra.mxu0 0.0
  %1060 = vmatpush.msra.mxu0 0.0
  %1061 = vmatpush.msra.mxu0 0.0
  %1062 = vmatpush.msra.mxu0 0.0
  %1063 = vmatpush.msra.mxu0 %v28
  %1064 = vmatpush.msra.mxu0 %v27
  %1065 = vmatpush.msra.mxu0 %v26
  %1066 = vmatpush.msra.mxu0 %v25
  %1067 = vmatmul.f32.gmra.mxu0 %v1049
  %v1068 = vpop.f32.mrf.mxu0
  %v1069 = vadd.f32 0.0, %v1068
  %1070 = vdwg.mxu0
  %v1071 = vadd.f32 %v1048, %v1069
  %v1072 = vxor.u32 %v1071, 2147483648
  %v1073 = vmul.f32 %v1072, 1.442695
  %v1074 = vpow.pop %v1073
  %v1075 = vadd.f32 %v1074, 1.0
  %v1076 = vrcp.pop %v1075
  %v1077 = vmul.f32 %v1075, %v1076
  %v1078 = vsub.f32 1.0, %v1077
  %v1079 = vmul.f32 %v1076, %v1078
  %v1080 = vadd.f32 %v1076, %v1079
  %vm1081 = vweird.f32 %v1075
  %vm1082 = vweird.f32 %v1076
  %vm1083 = vmor %vm1081, %vm1082
  %v1084 = vsel %vm1083, %v1076, %v1080
  %v1085 = vand.u32 2147483647, %v1075
  %vm1086 = vcmp.eq.f32.partialorder %v1085, 8.507059e+37
  %v1087 = vand.u32 %v1075, 2147483648
  %v1088 = vor.u32 1.1754944e-38, %v1087
  %v1089 = vsel %vm1086, %v1088, %v1084
  %v1090 = vmul.f32 1.0, %v1089
  %v1091 = vtanh.pop %v1071
  %v1092 = vmul.f32 %v1090, %v967
  %1094 = vrot.lane.b32.xlu0 %v1091, 64
  %v1095 = vpop.permute.xlu0 %1094
  %v1097 = vmul.f32 %v1090, %v1095
  %1099 = vrot.lane.b32.xlu0 %v1097, 32
  %v1100 = vpop.permute.xlu0 %1099
  %v1102 = vadd.f32 %v1092, %v1100
  %v1103 = vtanh.pop %v1102
  %1105 = vrot.lane.b32.xlu0 %v1103, 64
  %v1106 = vpop.permute.xlu0 %1105
  %v1108 = vmul.f32 %v1090, %v1106
  %1110 = vrot.lane.b32.xlu0 %v1108, 32
  %v1111 = vpop.permute.xlu0 %1110
  %1113 = vst.msk [vmem:[%s5] sm:$0x3] %vm96, %v1111
  %1114 = vst.msk [vmem:[%s6] sm:$0x3] %vm96, %v1044
  %s1115 = scalar_lea.vmem %s6, 2
  %1116 = vst.msk [vmem:[%s1115] sm:$0x3] %vm96, %v1111
  %1118 = vrot.lane.b32.xlu0 %v1035, 96
  %v1119 = vpop.permute.xlu0 %1118
  %1121 = vst.msk [vmem:[%s7] sm:$0x3] %vm96, %v1119
  %1123 = vrot.lane.b32.xlu0 %v1102, 96
  %v1124 = vpop.permute.xlu0 %1123
  %s1126 = scalar_lea.vmem %s7, 2
  %1127 = vst.msk [vmem:[%s1126] sm:$0x3] %vm96, %v1124
  // Predicated region
  $region18: #{encoder_forward.1} parent=0 // pred_check
    _
  $region19: #{encoder_forward.1} parent=0 // pred_check_branch
    %1129 = sbr.rel (0) target = $region21
  $region20: #{encoder_forward.1} parent=0 // pred_region
    _
  $region21: #{encoder_forward.1} parent=0 // pred_fallthru
    _
  // Predicated region
  $region22: #{encoder_forward.1} parent=0 // pred_check
    _
  $region23: #{encoder_forward.1} parent=0 // pred_check_branch
    %1131 = sbr.rel (0) target = $region25
  $region24: #{encoder_forward.1} parent=0 // pred_region
    _
  $region25: #{encoder_forward.1} parent=0 // pred_fallthru
    _
  // Predicated region
  $region26: #{encoder_forward.1} parent=0 // pred_check
    _
  $region27: #{encoder_forward.1} parent=0 // pred_check_branch
    %1133 = sbr.rel (0) target = $region29
  $region28: #{encoder_forward.1} parent=0 // pred_region
    _
  $region29: #{encoder_forward.1} parent=0 // pred_fallthru
    _
  // Predicated region
  $region30: #{encoder_forward.1} parent=0 // pred_check
    _
  $region31: #{encoder_forward.1} parent=0 // pred_check_branch
    %1135 = sbr.rel (0) target = $region33
  $region32: #{encoder_forward.1} parent=0 // pred_region
    _
  $region33: #{encoder_forward.1} parent=0 // pred_fallthru
    _
  // Predicated region
  $region34: #{encoder_forward.1} parent=0 // pred_check
    _
  $region35: #{encoder_forward.1} parent=0 // pred_check_branch
    %1137 = sbr.rel (0) target = $region37
  $region36: #{encoder_forward.1} parent=0 // pred_region
    _
  $region37: #{encoder_forward.1} parent=0 // pred_fallthru
    _
  // Predicated region
  $region38: #{encoder_forward.1} parent=0 // pred_check
    _
  $region39: #{encoder_forward.1} parent=0 // pred_check_branch
    %1139 = sbr.rel (0) target = $region41
  $region40: #{encoder_forward.1} parent=0 // pred_region
    _
  $region41: #{encoder_forward.1} parent=0 // pred_fallthru
    _
  // Predicated region
  $region42: #{encoder_forward.1} parent=0 // pred_check
    _
  $region43: #{encoder_forward.1} parent=0 // pred_check_branch
    %1141 = sbr.rel (0) target = $region45
  $region44: #{encoder_forward.1} parent=0 // pred_region
    _
  $region45: #{encoder_forward.1} parent=0 // pred_fallthru
    _
  // Predicated region
  $region46: #{encoder_forward.1} parent=0 // pred_check
    _
  $region47: #{encoder_forward.1} parent=0 // pred_check_branch
    %1143 = sbr.rel (0) target = $region49
  $region48: #{encoder_forward.1} parent=0 // pred_region
    _
  $region49: #{encoder_forward.1} parent=0 // pred_fallthru
    _

</llo_original>
